<compile_context>
chip_gen: v5e
topology: v5e:2x2
jax: 0.10.0
libtpu: 0.0.40
codegen_flags: <defaults>
</compile_context>

<pallas_src>
import functools
import math

import jax
import jax.numpy as jnp
from jax.experimental import pallas as pl
from jax.experimental.pallas import tpu as pltpu

# ----------------------------- model constants -----------------------------
D_MODEL = 512
D_STATE = 64
D_CONV = 4
EXPAND = 2
D_INNER = EXPAND * D_MODEL                                  # 1024
HEADDIM = 64
NHEADS = D_INNER // HEADDIM                                 # 16
NGROUPS = 1
D_IN_PROJ = 2 * D_INNER + 2 * NGROUPS * D_STATE + NHEADS    # 2192
CONV_DIM = D_INNER + 2 * NGROUPS * D_STATE                  # 1152
DT_PAD = 128                                                # dt block padded to 128 lanes
W_IN_PAD = D_INNER + CONV_DIM + DT_PAD                      # 2304
ATTN_DIM = 128
N_LAYERS = 2
NBRANCH = 3
EPS = 1e-5

CHUNK = 128          # SSD token chunk (sweepable; 256 fills v6e/v7x MXU)
FC_CHUNK = 512       # token tile for the fc1 projection
NEG_INF = -1e30


def _sigmoid(x):
    return 1.0 / (1.0 + jnp.exp(-x))


def _softplus(x):
    return jnp.maximum(x, 0.0) + jnp.log(1.0 + jnp.exp(-jnp.abs(x)))


# ----------------------------- fc1 (Linear + ReLU) ---------------------------
def _fc1_kernel(x_ref, w_ref, b_ref, o_ref):
    y = jnp.dot(x_ref[...].astype(jnp.bfloat16), w_ref[...],
                preferred_element_type=jnp.float32)
    o_ref[...] = jnp.maximum(y + b_ref[...], 0.0)


def fc1(x, w, b):
    n, k = x.shape
    n_pad = ((n + FC_CHUNK - 1) // FC_CHUNK) * FC_CHUNK
    if n_pad != n:
        x = jnp.concatenate([x, jnp.zeros((n_pad - n, k), jnp.float32)], axis=0)
    out = pl.pallas_call(
        _fc1_kernel,
        out_shape=jax.ShapeDtypeStruct((n_pad, D_MODEL), jnp.float32),
        grid=(n_pad // FC_CHUNK,),
        in_specs=[pl.BlockSpec((FC_CHUNK, k), lambda i: (i, 0)),
                  pl.BlockSpec((k, D_MODEL), lambda i: (0, 0)),
                  pl.BlockSpec((1, D_MODEL), lambda i: (0, 0))],
        out_specs=pl.BlockSpec((FC_CHUNK, D_MODEL), lambda i: (i, 0)),
        compiler_params=pltpu.CompilerParams(
            dimension_semantics=("parallel",),
            vmem_limit_bytes=32 * 1024 * 1024),
    )(x, w, b)
    return out[:n]
    # TODO(synk): nn.Dropout after fc1 is a training-time no-op (inference).


# ----------------------------- chunked Mamba2 block ---------------------------
def _mamba_chunk_kernel(h_ref, w_in_ref, convw_ref, convb_ref, dtb_ref,
                        a_ref, d_ref, normw_ref, wout_ref, expand_ref,
                        o_ref, state_scr, convprev_scr):
    c = pl.program_id(1)                                     # chunk index

    # reset carried SSM state + conv carry at the start of each branch sequence
    @pl.when(c == 0)
    def _():
        state_scr[...] = jnp.zeros_like(state_scr)
        convprev_scr[...] = jnp.zeros_like(convprev_scr)

    h = h_ref[...]                                           # (L, 512) f32
    h16 = h.astype(jnp.bfloat16)

    # ---- fused in_proj (bias free): one bf16 matmul -> [ z | xBC | dt | pad ]
    proj = jnp.dot(h16, w_in_ref[...], preferred_element_type=jnp.float32)   # (L, 2304)
    z = proj[:, :D_INNER]                                     # (L, 1024)
    xbc_pre = proj[:, D_INNER:D_INNER + CONV_DIM]             # (L, 1152)
    dt_raw = proj[:, D_INNER + CONV_DIM:D_INNER + CONV_DIM + NHEADS]   # (L, 16)

    # ---- causal depthwise conv1d (k=4) with an 8-row carry across chunks ----
    conv_w = convw_ref[...]                                   # (4, 1152)
    comb = jnp.concatenate([convprev_scr[...], xbc_pre], axis=0)  # (L+8, 1152)
    acc = xbc_pre * conv_w[D_CONV - 1:D_CONV, :] + convb_ref[...]
    for j in range(1, D_CONV):                                # taps at offsets -1,-2,-3
        acc = acc + (pltpu.roll(comb, shift=j, axis=0)[8:8 + CHUNK, :]
                     * conv_w[D_CONV - 1 - j:D_CONV - j, :])
    convprev_scr[...] = xbc_pre[CHUNK - 8:, :]                # carry last rows (pre-conv)
    xbc = acc * _sigmoid(acc)                                 # SiLU

    x = xbc[:, :D_INNER]                                      # (L, 1024)
    Bmat = xbc[:, D_INNER:D_INNER + D_STATE]                  # (L, 64)
    Cmat = xbc[:, D_INNER + D_STATE:]                         # (L, 64)
    Bm16 = Bmat.astype(jnp.bfloat16)
    Cm16 = Cmat.astype(jnp.bfloat16)
    BT16 = Bm16.T                                             # (64, L) bf16

    # ---- per-head dt and chunk-local decay cumsum (roll/add scan, no MXU) ---
    dt = _softplus(dt_raw + dtb_ref[...])                     # (L, 16)
    a = dt * a_ref[...]                                       # (L, 16)  (<= 0)
    cs = a
    row16 = jax.lax.broadcasted_iota(jnp.int32, (CHUNK, NHEADS), 0)
    shift = 1
    while shift < CHUNK:                                      # Hillis-Steele prefix sum
        rolled = pltpu.roll(cs, shift=shift, axis=0)
        cs = cs + jnp.where(row16 >= shift, rolled, 0.0)
        shift *= 2
    cs_last = cs[CHUNK - 1:CHUNK, :]                          # (1, 16)

    # ---- merged head -> d_inner lane expansion: one bf16 MXU pass ----------
    exp_cs = jnp.exp(cs)                                      # (L, 16)
    w_state = dt * jnp.exp(cs_last - cs)                      # (L, 16)
    stacked = jnp.concatenate([dt, exp_cs, w_state], axis=0).astype(jnp.bfloat16)
    expanded = jnp.dot(stacked, expand_ref[...],
                       preferred_element_type=jnp.float32)    # (3L, 1024)
    dt_full = expanded[:CHUNK, :]
    expcs_full = expanded[CHUNK:2 * CHUNK, :]
    w_state_full = expanded[2 * CHUNK:, :]
    decay_last = expcs_full[CHUNK - 1:CHUNK, :]               # exp(cs_last) expanded

    xdt = x * dt_full                                         # (L, 1024)

    # ---- inter-chunk contribution (bf16 MXU against carried state) ----------
    state = state_scr[...]                                    # (64, 1024) f32
    y = expcs_full * jnp.dot(Cm16, state.astype(jnp.bfloat16),
                             preferred_element_type=jnp.float32)

    # ---- state update: one wide bf16 (64,L)@(L,1024) matmul ------------------
    xw16 = (x * w_state_full).astype(jnp.bfloat16)
    state_scr[...] = decay_last * state + jnp.dot(
        BT16, xw16, preferred_element_type=jnp.float32)

    # ---- intra-chunk quadratic form (per-head, bf16 MXU) ---------------------
    CB = jnp.dot(Cm16, BT16, preferred_element_type=jnp.float32)   # (L, L)
    t_idx = jax.lax.broadcasted_iota(jnp.int32, (CHUNK, CHUNK), 0)
    s_idx = jax.lax.broadcasted_iota(jnp.int32, (CHUNK, CHUNK), 1)
    causal = s_idx <= t_idx
    csT = cs.T                                                 # (16, L)
    diff = csT[:, :, None] - csT[:, None, :]                   # (16, L, L) f32
    decay = jnp.exp(jnp.where(causal[None, :, :], diff,
                              NEG_INF).astype(jnp.bfloat16))   # masked BEFORE exp, bf16
    Mh = decay * CB.astype(jnp.bfloat16)[None, :, :]           # (16, L, L) bf16
    xh = xdt.astype(jnp.bfloat16).reshape(CHUNK, NHEADS, HEADDIM)   # (L, 16, 64)
    yh = jnp.einsum('hts,shd->thd', Mh, xh,
                    preferred_element_type=jnp.float32)        # (L, 16, 64)
    y = y + yh.reshape(CHUNK, D_INNER) + x * d_ref[...]        # intra + D skip

    # ---- gated RMSNorm (norm_before_gate=False) + out_proj + residual -------
    y = y * (z * _sigmoid(z))
    ms = jnp.mean(y * y, axis=-1, keepdims=True)
    y = y * jax.lax.rsqrt(ms + EPS) * normw_ref[...]
    out = jnp.dot(y.astype(jnp.bfloat16), wout_ref[...],
                  preferred_element_type=jnp.float32)
    o_ref[...] = out + h                                       # residual


def mamba_layer(h3, sp, expand):
    """Apply one (branch-stacked) Mamba2 layer.  h3: (3, Tp, 512), Tp % CHUNK == 0."""
    nb, tp, _ = h3.shape
    nchunks = tp // CHUNK

    tok = pl.BlockSpec((None, CHUNK, D_MODEL), lambda b, c: (b, c, 0))

    def _const_spec(arr):
        return pl.BlockSpec((None,) + arr.shape[1:], lambda b, c: (b, 0, 0))

    operands = (sp["w_in"], sp["conv_w"], sp["conv_b"], sp["dt_bias"],
                sp["a_row"], sp["d_full"], sp["norm_w"], sp["w_out"])

    return pl.pallas_call(
        _mamba_chunk_kernel,
        out_shape=jax.ShapeDtypeStruct((nb, tp, D_MODEL), jnp.float32),
        grid=(nb, nchunks),
        in_specs=[tok] + [_const_spec(p) for p in operands]
                 + [pl.BlockSpec(expand.shape, lambda b, c: (0, 0))],
        out_specs=tok,
        scratch_shapes=[pltpu.VMEM((D_STATE, D_INNER), jnp.float32),   # SSM state
                        pltpu.VMEM((8, CONV_DIM), jnp.float32)],       # conv carry (3 rows used)
        compiler_params=pltpu.CompilerParams(
            dimension_semantics=("parallel", "arbitrary"),
            vmem_limit_bytes=32 * 1024 * 1024),
    )(h3, *operands, expand)


# ------------ fused LayerNorm + attention pooling + classifier ---------------
def _pool_kernel(n_valid, h_ref, lng_ref, lnb_ref, wa1_ref, ba1_ref,
                 wa2_ref, ba2_ref, wc_ref, bc_ref, logits_ref,
                 m_scr, l_scr, acc_scr):
    b = pl.program_id(0)
    c = pl.program_id(1)
    nb = pl.num_programs(0)
    nc = pl.num_programs(1)

    @pl.when(jnp.logical_and(b == 0, c == 0))
    def _():
        m_scr[...] = jnp.full_like(m_scr, NEG_INF)
        l_scr[...] = jnp.zeros_like(l_scr)
        acc_scr[...] = jnp.zeros_like(acc_scr)

    h = h_ref[...]                                            # (CHUNK, 512)
    mu = jnp.mean(h, axis=-1, keepdims=True)
    dlt = h - mu
    var = jnp.mean(dlt * dlt, axis=-1, keepdims=True)
    hn = dlt * jax.lax.rsqrt(var + EPS) * lng_ref[...] + lnb_ref[...]

    a1 = _sigmoid(jnp.dot(hn, wa1_ref[...], preferred_element_type=jnp.float32)
                  + ba1_ref[...])                             # (CHUNK, 128)
    s = jnp.dot(a1, wa2_ref[...], preferred_element_type=jnp.float32) + ba2_ref[...]
    s_row = s.reshape(1, CHUNK)                               # lane-major scores

    col = jax.lax.broadcasted_iota(jnp.int32, (1, CHUNK), 1) + c * CHUNK
    s_row = jnp.where(col < n_valid, s_row, NEG_INF)          # mask padded tokens

    # online softmax over all (branch, token) positions
    m_prev = m_scr[...]
    m_new = jnp.maximum(m_prev, jnp.max(s_row, axis=-1, keepdims=True))
    scale = jnp.exp(m_prev - m_new)
    p_row = jnp.exp(s_row - m_new)                            # (1, CHUNK)
    l_scr[...] = l_scr[...] * scale + jnp.sum(p_row, axis=-1, keepdims=True)
    acc_scr[...] = acc_scr[...] * scale + jnp.dot(
        p_row, hn, preferred_element_type=jnp.float32)        # MXU weighted sum
    m_scr[...] = m_new

    @pl.when(jnp.logical_and(b == nb - 1, c == nc - 1))
    def _():
        pooled = acc_scr[...] / l_scr[...]                    # (1, 512)
        logits_ref[...] = (jnp.dot(pooled, wc_ref[...],
                                   preferred_element_type=jnp.float32) + bc_ref[...])


def attn_pool_classify(h3, n_valid, params, n_classes):
    """Pool over all branches/tokens of h3 directly (no concat round trip)."""
    nb, tp, _ = h3.shape
    nchunks = tp // CHUNK

    small = (params["ln_g"], params["ln_b"], params["attn_w1"], params["attn_b1"],
             params["attn_w2"], params["attn_b2"], params["cls_w"], params["cls_b"])
    const2 = lambda b, c: (0, 0)

    # TODO(synk): pass n_valid via scalar prefetch + bucketed padding to avoid
    # recompiling per bag size in a production variable-length setting.
    return pl.pallas_call(
        functools.partial(_pool_kernel, n_valid),
        out_shape=jax.ShapeDtypeStruct((1, n_classes), jnp.float32),
        grid=(nb, nchunks),
        in_specs=[pl.BlockSpec((None, CHUNK, D_MODEL), lambda b, c: (b, c, 0))]
                 + [pl.BlockSpec(p.shape, const2) for p in small],
        out_specs=pl.BlockSpec((1, n_classes), const2),
        scratch_shapes=[pltpu.VMEM((1, 1), jnp.float32),
                        pltpu.VMEM((1, 1), jnp.float32),
                        pltpu.VMEM((1, D_MODEL), jnp.float32)],
        compiler_params=pltpu.CompilerParams(
            dimension_semantics=("arbitrary", "arbitrary"),
            vmem_limit_bytes=32 * 1024 * 1024),
    )(h3, *small)


# ----------------------------- parameter init --------------------------------
def _xavier(key, fan_in, fan_out):
    std = math.sqrt(2.0 / (fan_in + fan_out))
    return std * jax.random.normal(key, (fan_in, fan_out), jnp.float32)


def init_mamba_params(key):
    k1, k2, k3 = jax.random.split(key, 3)
    w_in = _xavier(k1, D_MODEL, D_IN_PROJ)                    # [ z | xBC | dt ]
    w_in = jnp.concatenate(
        [w_in, jnp.zeros((D_MODEL, W_IN_PAD - D_IN_PROJ), jnp.float32)], axis=1)
    return dict(
        w_in=w_in.astype(jnp.bfloat16),                       # (512, 2304)
        conv_w=0.1 * jax.random.normal(k2, (D_CONV, CONV_DIM), jnp.float32),
        conv_b=jnp.zeros((1, CONV_DIM), jnp.float32),
        dt_bias=jnp.full((1, NHEADS), math.log(math.expm1(0.01)), jnp.float32),
        a_row=-jnp.arange(1, NHEADS + 1, dtype=jnp.float32)[None, :],  # A = -exp(A_log)
        d_full=jnp.ones((1, D_INNER), jnp.float32),
        norm_w=jnp.ones((1, D_INNER), jnp.float32),
        w_out=_xavier(k3, D_INNER, D_MODEL).astype(jnp.bfloat16),
    )


def init_params(key, in_dim, n_classes):
    keys = jax.random.split(key, 4 + NBRANCH * N_LAYERS)
    # head -> d_inner lane-expansion matrix E[h, h*HEADDIM + d] = 1 (exact in bf16)
    expand = (jnp.arange(D_INNER)[None, :] // HEADDIM
              == jnp.arange(NHEADS)[:, None]).astype(jnp.bfloat16)
    params = dict(
        fc1_w=_xavier(keys[0], in_dim, D_MODEL).astype(jnp.bfloat16),
        fc1_b=jnp.zeros((1, D_MODEL), jnp.float32),
        ln_g=jnp.ones((1, D_MODEL), jnp.float32),
        ln_b=jnp.zeros((1, D_MODEL), jnp.float32),
        attn_w1=_xavier(keys[1], D_MODEL, ATTN_DIM),
        attn_b1=jnp.zeros((1, ATTN_DIM), jnp.float32),
        attn_w2=_xavier(keys[2], ATTN_DIM, 1),
        attn_b2=jnp.zeros((1, 1), jnp.float32),
        cls_w=_xavier(keys[3], D_MODEL, n_classes),
        cls_b=jnp.zeros((1, n_classes), jnp.float32),
        expand=expand,
    )
    branches = [[init_mamba_params(keys[4 + b * N_LAYERS + l])
                 for l in range(N_LAYERS)] for b in range(NBRANCH)]
    params["mamba_layers"] = [
        {k: jnp.stack([branches[0][l][k], branches[1][l][k], branches[2][l][k]],
                      axis=0) for k in branches[0][l]}
        for l in range(N_LAYERS)]
    return params


# ----------------------------- full forward ----------------------------------
def momil_forward(x, params, n_classes):
    # x: (N, in_dim); torch expands to batch 1, which is kept implicit.
    h = fc1(x.astype(jnp.float32), params["fc1_w"], params["fc1_b"])

    n = h.shape[0]
    hw = int(math.ceil(math.sqrt(n)))
    add_length = hw * hw - n
    if add_length > 0:
        h = jnp.concatenate([h, h[:add_length]], axis=0)
    tr = hw * hw                                              # tokens per branch

    # three token orderings (branches); torch `.flip([-1])` flips the FEATURE dim
    b0 = h
    b1 = jnp.flip(h, axis=-1)
    b2 = h.reshape(hw, hw, D_MODEL).transpose(1, 0, 2).reshape(tr, D_MODEL)
    h3 = jnp.stack([b0, b1, b2], axis=0)                      # (3, Tr, 512)

    # pad tokens to a multiple of CHUNK (causal end padding, masked at pooling)
    tp = ((tr + CHUNK - 1) // CHUNK) * CHUNK
    if tp != tr:
        h3 = jnp.concatenate(
            [h3, jnp.zeros((NBRANCH, tp - tr, D_MODEL), jnp.float32)], axis=1)

    for sp in params["mamba_layers"]:
        h3 = mamba_layer(h3, sp, params["expand"])            # residual is inside

    logits = attn_pool_classify(h3, tr, params, n_classes)    # (1, n_classes)
    y_prob = jax.nn.softmax(logits, axis=1)
    y_hat = jnp.argmax(logits, axis=1)
    return logits, y_prob, y_hat, None, None


# ----------------------------- main ------------------------------------------
if __name__ == "__main__":
    IN_DIM = 64
    N_INSTANCES = 8
    N_CLASSES = 2

    key = jax.random.PRNGKey(0)
    kx, kp = jax.random.split(key)
    x = jax.random.normal(kx, (N_INSTANCES, IN_DIM), jnp.float32)
    params = init_params(kp, IN_DIM, N_CLASSES)

    logits, y_prob, y_hat, a_raw, results = momil_forward(x, params, N_CLASSES)
    jax.block_until_ready(logits)
    jax.block_until_ready(y_prob)
    jax.block_until_ready(y_hat)
    assert logits.shape == (1, N_CLASSES)
    assert y_prob.shape == (1, N_CLASSES)
    assert bool(jnp.all(jnp.isfinite(logits)))
    print("KERNEL_OK")
</pallas_src>

<mosaic_0001>
module attributes {stable_mosaic.version = 11 : i64} {
  func.func @_fc1_kernel(%arg0: i32, %arg1: memref<512x64xf32, #tpu.memory_space<vmem>>, %arg2: memref<64x512xbf16, #tpu.memory_space<vmem>>, %arg3: memref<1x512xf32, #tpu.memory_space<vmem>>, %arg4: memref<512x512xf32, #tpu.memory_space<vmem>>) attributes {dimension_semantics = [#tpu.dimension_semantics<parallel>], iteration_bounds = array<i64: 1>, scalar_prefetch = 0 : i64, scratch_operands = 0 : i64, tpu.core_type = #tpu.core_type<tc>, window_params = [{transform_indices = @transform_0, window_bounds = array<i64: 512, 64>}, {pipeline_mode = #tpu.pipeline_mode<synchronous>, transform_indices = @transform_1, window_bounds = array<i64: 64, 512>}, {pipeline_mode = #tpu.pipeline_mode<synchronous>, transform_indices = @transform_2, window_bounds = array<i64: 1, 512>}, {transform_indices = @transform_3, window_bounds = array<i64: 512, 512>}]} {
    %c0 = arith.constant 0 : index
    %c0_0 = arith.constant 0 : index
    %0 = vector.load %arg1[%c0, %c0_0] : memref<512x64xf32, #tpu.memory_space<vmem>>, vector<512x64xf32>
    %1 = arith.truncf %0 : vector<512x64xf32> to vector<512x64xbf16>
    %c0_1 = arith.constant 0 : index
    %c0_2 = arith.constant 0 : index
    %2 = vector.load %arg2[%c0_1, %c0_2] : memref<64x512xbf16, #tpu.memory_space<vmem>>, vector<64x512xbf16>
    %cst = arith.constant dense<0.000000e+00> : vector<512x512xf32>
    %3 = tpu.matmul %1, %2, %cst {dimension_numbers = #tpu.dot_dimension_numbers<[1], [0], [0], [1], [0, 0, 1, 1], [], []>} : vector<512x64xbf16>, vector<64x512xbf16>, vector<512x512xf32> -> vector<512x512xf32>
    %c0_3 = arith.constant 0 : index
    %c0_4 = arith.constant 0 : index
    %4 = vector.load %arg3[%c0_3, %c0_4] : memref<1x512xf32, #tpu.memory_space<vmem>>, vector<1x512xf32>
    %5 = vector.broadcast %4 : vector<1x512xf32> to vector<512x512xf32>
    %6 = arith.addf %3, %5 : vector<512x512xf32>
    %cst_5 = arith.constant 0.000000e+00 : f32
    %7 = vector.broadcast %cst_5 : f32 to vector<512x512xf32>
    %8 = arith.maximumf %6, %7 : vector<512x512xf32>
    %c0_6 = arith.constant 0 : index
    %c0_7 = arith.constant 0 : index
    %9 = vector.load %arg4[%c0_6, %c0_7] : memref<512x512xf32, #tpu.memory_space<vmem>>, vector<512x512xf32>
    tpu.vector_store %arg4[%c0_6, %c0_7], %8 {strides = array<i32>} : memref<512x512xf32, #tpu.memory_space<vmem>>, vector<512x512xf32>,
    return
  }
  func.func @transform_0(%arg0: i32) -> (i32, i32) {
    %c0_i32 = arith.constant 0 : i32
    %c0_i32_0 = arith.constant 0 : i32
    return %arg0, %c0_i32 : i32, i32
  }
  func.func @transform_1(%arg0: i32) -> (i32, i32) {
    %c0_i32 = arith.constant 0 : i32
    %c0_i32_0 = arith.constant 0 : i32
    %c0_i32_1 = arith.constant 0 : i32
    return %c0_i32, %c0_i32_0 : i32, i32
  }
  func.func @transform_2(%arg0: i32) -> (i32, i32) {
    %c0_i32 = arith.constant 0 : i32
    %c0_i32_0 = arith.constant 0 : i32
    %c0_i32_1 = arith.constant 0 : i32
    return %c0_i32, %c0_i32_0 : i32, i32
  }
  func.func @transform_3(%arg0: i32) -> (i32, i32) {
    %c0_i32 = arith.constant 0 : i32
    %c0_i32_0 = arith.constant 0 : i32
    return %arg0, %c0_i32 : i32, i32
  }
}

</mosaic_0001>

<llo_original>
// kernel: tpu_custom_call.1
$region0: #{tpu_custom_call.1}
  #allocation0 [shape = 'u32[]', space=smem, size = 0x4, offset = 0x4, fixed_abs, tag = 'smem constant byte address 0x4 - core index']
  #allocation1 [shape = 'u32[72,128]{1,0:T(1,128)}', space=vmem, size = 0x9000, scoped, tag = 'internal scratch']
  %s0 = inlined_call_operand.vmem [shape: f32[512,64], index: 0, kind: input, shape index: {}]
  %s1 = inlined_call_operand.vmem [shape: bf16[64,512], index: 1, kind: input, shape index: {}]
  %s2 = inlined_call_operand.vmem [shape: f32[1,512], index: 2, kind: input, shape index: {}]
  %s3 = inlined_call_operand.hbm [shape: f32[512,512], index: 3, kind: output, shape index: {}]
  %s4 = sld [smem:[#allocation0]]
  $region22: #{tpu_custom_call.1} parent=0
    _
  %s6 = ssub.s32 1, %s4
  %s7 = scalar_select 0, %s6, %s4
  $region1: #{tpu_custom_call.1} parent=0
    #allocation2 [shape = 'u8[1048576]{0}', space=vmem, size = 0x100000, scoped, tag = 'output window, operand 0, single buffered']
    #allocation3 [shape = 's32[1]{0}', space=sflag, size = 0x4, scoped, tag = 'scoped memory for tpu_custom_call.1']
    %8 = vsyncpa [#allocation3], 0
    // Predicated region
    $region2: #{tpu_custom_call.1} parent=1 // pred_check
      _
    $region3: #{tpu_custom_call.1} parent=1 // pred_check_branch
      %10 = sbr.rel (0) target = $region5
    $region4: #{tpu_custom_call.1} parent=1 // pred_region
      _
    $region5: #{tpu_custom_call.1} parent=1 // pred_fallthru
      _
    // Predicated region
    $region6: #{tpu_custom_call.1} parent=1 // pred_check
      _
    $region7: #{tpu_custom_call.1} parent=1 // pred_check_branch
      %12 = sbr.rel (0) target = $region9
    $region8: #{tpu_custom_call.1} parent=1 // pred_region
      _
    $region9: #{tpu_custom_call.1} parent=1 // pred_fallthru
      _
    // Predicated region
    $region10: #{tpu_custom_call.1} parent=1 // pred_check
      _
    $region11: #{tpu_custom_call.1} parent=1 // pred_check_branch
      %14 = sbr.rel (0) target = $region13
    $region12: #{tpu_custom_call.1} parent=1 // pred_region
      _
    $region13: #{tpu_custom_call.1} parent=1 // pred_fallthru
      _
    %v16 = vld [vmem:[%s0] sm:$0xff]
    %v17 = vld [vmem:[%s0 + $0x8] sm:$0xff]
    %v18 = vld [vmem:[%s0 + $0x10] sm:$0xff]
    %v19 = vld [vmem:[%s0 + $0x18] sm:$0xff]
    %v20 = vld [vmem:[%s0 + $0x20] sm:$0xff]
    %v21 = vld [vmem:[%s0 + $0x28] sm:$0xff]
    %v22 = vld [vmem:[%s0 + $0x30] sm:$0xff]
    %v23 = vld [vmem:[%s0 + $0x38] sm:$0xff]
    %v24 = vld [vmem:[%s0 + $0x40] sm:$0xff]
    %v25 = vld [vmem:[%s0 + $0x48] sm:$0xff]
    %v26 = vld [vmem:[%s0 + $0x50] sm:$0xff]
    %v27 = vld [vmem:[%s0 + $0x58] sm:$0xff]
    %v28 = vld [vmem:[%s0 + $0x60] sm:$0xff]
    %v29 = vld [vmem:[%s0 + $0x68] sm:$0xff]
    %v30 = vld [vmem:[%s0 + $0x70] sm:$0xff]
    %v31 = vld [vmem:[%s0 + $0x78] sm:$0xff]
    %v32 = vld [vmem:[%s0 + $0x80] sm:$0xff]
    %v33 = vld [vmem:[%s0 + $0x88] sm:$0xff]
    %v34 = vld [vmem:[%s0 + $0x90] sm:$0xff]
    %v35 = vld [vmem:[%s0 + $0x98] sm:$0xff]
    %v36 = vld [vmem:[%s0 + $0xa0] sm:$0xff]
    %v37 = vld [vmem:[%s0 + $0xa8] sm:$0xff]
    %v38 = vld [vmem:[%s0 + $0xb0] sm:$0xff]
    %v39 = vld [vmem:[%s0 + $0xb8] sm:$0xff]
    %v40 = vld [vmem:[%s0 + $0xc0] sm:$0xff]
    %v41 = vld [vmem:[%s0 + $0xc8] sm:$0xff]
    %v42 = vld [vmem:[%s0 + $0xd0] sm:$0xff]
    %v43 = vld [vmem:[%s0 + $0xd8] sm:$0xff]
    %v44 = vld [vmem:[%s0 + $0xe0] sm:$0xff]
    %v45 = vld [vmem:[%s0 + $0xe8] sm:$0xff]
    %v46 = vld [vmem:[%s0 + $0xf0] sm:$0xff]
    %v47 = vld [vmem:[%s0 + $0xf8] sm:$0xff]
    %v48 = vld [vmem:[%s0 + $0x100] sm:$0xff]
    %v49 = vld [vmem:[%s0 + $0x108] sm:$0xff]
    %v50 = vld [vmem:[%s0 + $0x110] sm:$0xff]
    %v51 = vld [vmem:[%s0 + $0x118] sm:$0xff]
    %v52 = vld [vmem:[%s0 + $0x120] sm:$0xff]
    %v53 = vld [vmem:[%s0 + $0x128] sm:$0xff]
    %v54 = vld [vmem:[%s0 + $0x130] sm:$0xff]
    %v55 = vld [vmem:[%s0 + $0x138] sm:$0xff]
    %v56 = vld [vmem:[%s0 + $0x140] sm:$0xff]
    %v57 = vld [vmem:[%s0 + $0x148] sm:$0xff]
    %v58 = vld [vmem:[%s0 + $0x150] sm:$0xff]
    %v59 = vld [vmem:[%s0 + $0x158] sm:$0xff]
    %v60 = vld [vmem:[%s0 + $0x160] sm:$0xff]
    %v61 = vld [vmem:[%s0 + $0x168] sm:$0xff]
    %v62 = vld [vmem:[%s0 + $0x170] sm:$0xff]
    %v63 = vld [vmem:[%s0 + $0x178] sm:$0xff]
    %v64 = vld [vmem:[%s0 + $0x180] sm:$0xff]
    %v65 = vld [vmem:[%s0 + $0x188] sm:$0xff]
    %v66 = vld [vmem:[%s0 + $0x190] sm:$0xff]
    %v67 = vld [vmem:[%s0 + $0x198] sm:$0xff]
    %v68 = vld [vmem:[%s0 + $0x1a0] sm:$0xff]
    %v69 = vld [vmem:[%s0 + $0x1a8] sm:$0xff]
    %v70 = vld [vmem:[%s0 + $0x1b0] sm:$0xff]
    %v71 = vld [vmem:[%s0 + $0x1b8] sm:$0xff]
    %v72 = vld [vmem:[%s0 + $0x1c0] sm:$0xff]
    %v73 = vld [vmem:[%s0 + $0x1c8] sm:$0xff]
    %v74 = vld [vmem:[%s0 + $0x1d0] sm:$0xff]
    %v75 = vld [vmem:[%s0 + $0x1d8] sm:$0xff]
    %v76 = vld [vmem:[%s0 + $0x1e0] sm:$0xff]
    %v77 = vld [vmem:[%s0 + $0x1e8] sm:$0xff]
    %v78 = vld [vmem:[%s0 + $0x1f0] sm:$0xff]
    %v79 = vld [vmem:[%s0 + $0x1f8] sm:$0xff]
    %v80 = vpack.c.bf16 %v17, %v16
    %v81 = vpack.c.bf16 %v19, %v18
    %v82 = vpack.c.bf16 %v21, %v20
    %v83 = vpack.c.bf16 %v23, %v22
    %v84 = vpack.c.bf16 %v25, %v24
    %v85 = vpack.c.bf16 %v27, %v26
    %v86 = vpack.c.bf16 %v29, %v28
    %v87 = vpack.c.bf16 %v31, %v30
    %v88 = vpack.c.bf16 %v33, %v32
    %v89 = vpack.c.bf16 %v35, %v34
    %v90 = vpack.c.bf16 %v37, %v36
    %v91 = vpack.c.bf16 %v39, %v38
    %v92 = vpack.c.bf16 %v41, %v40
    %v93 = vpack.c.bf16 %v43, %v42
    %v94 = vpack.c.bf16 %v45, %v44
    %v95 = vpack.c.bf16 %v47, %v46
    %v96 = vpack.c.bf16 %v49, %v48
    %v97 = vpack.c.bf16 %v51, %v50
    %v98 = vpack.c.bf16 %v53, %v52
    %v99 = vpack.c.bf16 %v55, %v54
    %v100 = vpack.c.bf16 %v57, %v56
    %v101 = vpack.c.bf16 %v59, %v58
    %v102 = vpack.c.bf16 %v61, %v60
    %v103 = vpack.c.bf16 %v63, %v62
    %v104 = vpack.c.bf16 %v65, %v64
    %v105 = vpack.c.bf16 %v67, %v66
    %v106 = vpack.c.bf16 %v69, %v68
    %v107 = vpack.c.bf16 %v71, %v70
    %v108 = vpack.c.bf16 %v73, %v72
    %v109 = vpack.c.bf16 %v75, %v74
    %v110 = vpack.c.bf16 %v77, %v76
    %v111 = vpack.c.bf16 %v79, %v78
    %v112 = vld [vmem:[%s1] sm:$0xff]
    %v113 = vld [vmem:[%s1 + $0x8] sm:$0xff]
    %v114 = vld [vmem:[%s1 + $0x10] sm:$0xff]
    %v115 = vld [vmem:[%s1 + $0x18] sm:$0xff]
    %v116 = vld [vmem:[%s1 + $0x20] sm:$0xff]
    %v117 = vld [vmem:[%s1 + $0x28] sm:$0xff]
    %v118 = vld [vmem:[%s1 + $0x30] sm:$0xff]
    %v119 = vld [vmem:[%s1 + $0x38] sm:$0xff]
    %v120 = vld [vmem:[%s1 + $0x40] sm:$0xff]
    %v121 = vld [vmem:[%s1 + $0x48] sm:$0xff]
    %v122 = vld [vmem:[%s1 + $0x50] sm:$0xff]
    %v123 = vld [vmem:[%s1 + $0x58] sm:$0xff]
    %v124 = vld [vmem:[%s1 + $0x60] sm:$0xff]
    %v125 = vld [vmem:[%s1 + $0x68] sm:$0xff]
    %v126 = vld [vmem:[%s1 + $0x70] sm:$0xff]
    %v127 = vld [vmem:[%s1 + $0x78] sm:$0xff]
    %v128 = vld [vmem:[%s2] sm:$0xf]
    %v130 = vperm.slane %v128, 0
    %v131 = vperm.slane %v128, 1
    %v132 = vperm.slane %v128, 2
    %v133 = vperm.slane %v128, 3
    %v154 = vunpack.c.l.b16 %v112
    %v155 = vunpack.c.h.b16 %v112
    %v156 = vunpack.c.l.b16 %v113
    %v157 = vunpack.c.h.b16 %v113
    %v158 = vunpack.c.l.b16 %v114
    %v159 = vunpack.c.h.b16 %v114
    %v160 = vunpack.c.l.b16 %v115
    %v161 = vunpack.c.h.b16 %v115
    %v162 = vunpack.c.l.b16 %v116
    %v163 = vunpack.c.h.b16 %v116
    %v164 = vunpack.c.l.b16 %v117
    %v165 = vunpack.c.h.b16 %v117
    %v166 = vunpack.c.l.b16 %v118
    %v167 = vunpack.c.h.b16 %v118
    %v168 = vunpack.c.l.b16 %v119
    %v169 = vunpack.c.h.b16 %v119
    %v170 = vunpack.c.l.b16 %v120
    %v171 = vunpack.c.h.b16 %v120
    %v172 = vunpack.c.l.b16 %v121
    %v173 = vunpack.c.h.b16 %v121
    %v174 = vunpack.c.l.b16 %v122
    %v175 = vunpack.c.h.b16 %v122
    %v176 = vunpack.c.l.b16 %v123
    %v177 = vunpack.c.h.b16 %v123
    %v178 = vunpack.c.l.b16 %v124
    %v179 = vunpack.c.h.b16 %v124
    %v180 = vunpack.c.l.b16 %v125
    %v181 = vunpack.c.h.b16 %v125
    %v182 = vunpack.c.l.b16 %v126
    %v183 = vunpack.c.h.b16 %v126
    %v184 = vunpack.c.l.b16 %v127
    %v185 = vunpack.c.h.b16 %v127
    %v186 = vpack.c.b16 %v158, %v154
    %v187 = vpack.c.b16 %v159, %v155
    %v188 = vpack.c.b16 %v160, %v156
    %v189 = vpack.c.b16 %v161, %v157
    %v190 = vpack.c.b16 %v166, %v162
    %v191 = vpack.c.b16 %v167, %v163
    %v192 = vpack.c.b16 %v168, %v164
    %v193 = vpack.c.b16 %v169, %v165
    %v194 = vpack.c.b16 %v174, %v170
    %v195 = vpack.c.b16 %v175, %v171
    %v196 = vpack.c.b16 %v176, %v172
    %v197 = vpack.c.b16 %v177, %v173
    %v198 = vpack.c.b16 %v182, %v178
    %v199 = vpack.c.b16 %v183, %v179
    %v200 = vpack.c.b16 %v184, %v180
    %v201 = vpack.c.b16 %v185, %v181
    %vm218 = vcmask 523264
    %v220 = vsel %vm218, %v80, 0
    %v223 = vsel %vm218, %v81, 0
    %v226 = vsel %vm218, %v82, 0
    %v229 = vsel %vm218, %v83, 0
    %v232 = vsel %vm218, %v84, 0
    %v235 = vsel %vm218, %v85, 0
    %v238 = vsel %vm218, %v86, 0
    %v241 = vsel %vm218, %v87, 0
    %v244 = vsel %vm218, %v88, 0
    %v247 = vsel %vm218, %v89, 0
    %v250 = vsel %vm218, %v90, 0
    %v253 = vsel %vm218, %v91, 0
    %v256 = vsel %vm218, %v92, 0
    %v259 = vsel %vm218, %v93, 0
    %v262 = vsel %vm218, %v94, 0
    %v265 = vsel %vm218, %v95, 0
    %v268 = vsel %vm218, %v96, 0
    %v271 = vsel %vm218, %v97, 0
    %v274 = vsel %vm218, %v98, 0
    %v277 = vsel %vm218, %v99, 0
    %v280 = vsel %vm218, %v100, 0
    %v283 = vsel %vm218, %v101, 0
    %v286 = vsel %vm218, %v102, 0
    %v289 = vsel %vm218, %v103, 0
    %v292 = vsel %vm218, %v104, 0
    %v295 = vsel %vm218, %v105, 0
    %v298 = vsel %vm218, %v106, 0
    %v301 = vsel %vm218, %v107, 0
    %v304 = vsel %vm218, %v108, 0
    %v307 = vsel %vm218, %v109, 0
    %v310 = vsel %vm218, %v110, 0
    %v313 = vsel %vm218, %v111, 0
    %315 = vmatpush.bf16.msra.mxu0 0
    %316 = vmatpush.bf16.msra.mxu0 0
    %317 = vmatpush.bf16.msra.mxu0 0
    %318 = vmatpush.bf16.msra.mxu0 0
    %319 = vmatpush.bf16.msra.mxu0 %v198
    %320 = vmatpush.bf16.msra.mxu0 %v194
    %321 = vmatpush.bf16.msra.mxu0 %v190
    %322 = vmatpush.bf16.msra.mxu0 %v186
    %323 = vmatmul.bf16.gmra.mxu0 %v220
    %v324 = vpop.f32.mrf.mxu0
    %v325 = vadd.f32 %v130, %v324
    %v326 = vpop.f32.mrf.mxu0
    %v327 = vadd.f32 %v130, %v326
    %328 = vmatmul.bf16.gmra.mxu0 %v223
    %v329 = vpop.f32.mrf.mxu0
    %v330 = vadd.f32 %v130, %v329
    %v331 = vpop.f32.mrf.mxu0
    %v332 = vadd.f32 %v130, %v331
    %333 = vmatmul.bf16.gmra.mxu0 %v226
    %v334 = vpop.f32.mrf.mxu0
    %v335 = vadd.f32 %v130, %v334
    %v336 = vpop.f32.mrf.mxu0
    %v337 = vadd.f32 %v130, %v336
    %338 = vmatmul.bf16.gmra.mxu0 %v229
    %v339 = vpop.f32.mrf.mxu0
    %v340 = vadd.f32 %v130, %v339
    %v341 = vpop.f32.mrf.mxu0
    %v342 = vadd.f32 %v130, %v341
    %343 = vmatmul.bf16.gmra.mxu0 %v232
    %v344 = vpop.f32.mrf.mxu0
    %v345 = vadd.f32 %v130, %v344
    %v346 = vpop.f32.mrf.mxu0
    %v347 = vadd.f32 %v130, %v346
    %348 = vmatmul.bf16.gmra.mxu0 %v235
    %v349 = vpop.f32.mrf.mxu0
    %v350 = vadd.f32 %v130, %v349
    %v351 = vpop.f32.mrf.mxu0
    %v352 = vadd.f32 %v130, %v351
    %353 = vmatmul.bf16.gmra.mxu0 %v238
    %v354 = vpop.f32.mrf.mxu0
    %v355 = vadd.f32 %v130, %v354
    %v356 = vpop.f32.mrf.mxu0
    %v357 = vadd.f32 %v130, %v356
    %358 = vmatmul.bf16.gmra.mxu0 %v241
    %v359 = vpop.f32.mrf.mxu0
    %v360 = vadd.f32 %v130, %v359
    %v361 = vpop.f32.mrf.mxu0
    %v362 = vadd.f32 %v130, %v361
    %363 = vmatmul.bf16.gmra.mxu0 %v244
    %v364 = vpop.f32.mrf.mxu0
    %v365 = vadd.f32 %v130, %v364
    %v366 = vpop.f32.mrf.mxu0
    %v367 = vadd.f32 %v130, %v366
    %368 = vmatmul.bf16.gmra.mxu0 %v247
    %v369 = vpop.f32.mrf.mxu0
    %v370 = vadd.f32 %v130, %v369
    %v371 = vpop.f32.mrf.mxu0
    %v372 = vadd.f32 %v130, %v371
    %373 = vmatmul.bf16.gmra.mxu0 %v250
    %v374 = vpop.f32.mrf.mxu0
    %v375 = vadd.f32 %v130, %v374
    %v376 = vpop.f32.mrf.mxu0
    %v377 = vadd.f32 %v130, %v376
    %378 = vmatmul.bf16.gmra.mxu0 %v253
    %v379 = vpop.f32.mrf.mxu0
    %v380 = vadd.f32 %v130, %v379
    %v381 = vpop.f32.mrf.mxu0
    %v382 = vadd.f32 %v130, %v381
    %383 = vmatmul.bf16.gmra.mxu0 %v256
    %v384 = vpop.f32.mrf.mxu0
    %v385 = vadd.f32 %v130, %v384
    %v386 = vpop.f32.mrf.mxu0
    %v387 = vadd.f32 %v130, %v386
    %388 = vmatmul.bf16.gmra.mxu0 %v259
    %v389 = vpop.f32.mrf.mxu0
    %v390 = vadd.f32 %v130, %v389
    %v391 = vpop.f32.mrf.mxu0
    %v392 = vadd.f32 %v130, %v391
    %393 = vmatmul.bf16.gmra.mxu0 %v262
    %v394 = vpop.f32.mrf.mxu0
    %v395 = vadd.f32 %v130, %v394
    %v396 = vpop.f32.mrf.mxu0
    %v397 = vadd.f32 %v130, %v396
    %398 = vmatmul.bf16.gmra.mxu0 %v265
    %v399 = vpop.f32.mrf.mxu0
    %v400 = vadd.f32 %v130, %v399
    %v401 = vpop.f32.mrf.mxu0
    %v402 = vadd.f32 %v130, %v401
    %403 = vmatmul.bf16.gmra.mxu0 %v268
    %v404 = vpop.f32.mrf.mxu0
    %v405 = vadd.f32 %v130, %v404
    %v406 = vpop.f32.mrf.mxu0
    %v407 = vadd.f32 %v130, %v406
    %408 = vmatmul.bf16.gmra.mxu0 %v271
    %v409 = vpop.f32.mrf.mxu0
    %v410 = vadd.f32 %v130, %v409
    %v411 = vpop.f32.mrf.mxu0
    %v412 = vadd.f32 %v130, %v411
    %413 = vmatmul.bf16.gmra.mxu0 %v274
    %v414 = vpop.f32.mrf.mxu0
    %v415 = vadd.f32 %v130, %v414
    %v416 = vpop.f32.mrf.mxu0
    %v417 = vadd.f32 %v130, %v416
    %418 = vmatmul.bf16.gmra.mxu0 %v277
    %v419 = vpop.f32.mrf.mxu0
    %v420 = vadd.f32 %v130, %v419
    %v421 = vpop.f32.mrf.mxu0
    %v422 = vadd.f32 %v130, %v421
    %423 = vmatmul.bf16.gmra.mxu0 %v280
    %v424 = vpop.f32.mrf.mxu0
    %v425 = vadd.f32 %v130, %v424
    %v426 = vpop.f32.mrf.mxu0
    %v427 = vadd.f32 %v130, %v426
    %428 = vmatmul.bf16.gmra.mxu0 %v283
    %v429 = vpop.f32.mrf.mxu0
    %v430 = vadd.f32 %v130, %v429
    %v431 = vpop.f32.mrf.mxu0
    %v432 = vadd.f32 %v130, %v431
    %433 = vmatmul.bf16.gmra.mxu0 %v286
    %v434 = vpop.f32.mrf.mxu0
    %v435 = vadd.f32 %v130, %v434
    %v436 = vpop.f32.mrf.mxu0
    %v437 = vadd.f32 %v130, %v436
    %438 = vmatmul.bf16.gmra.mxu0 %v289
    %v439 = vpop.f32.mrf.mxu0
    %v440 = vadd.f32 %v130, %v439
    %v441 = vpop.f32.mrf.mxu0
    %v442 = vadd.f32 %v130, %v441
    %443 = vmatmul.bf16.gmra.mxu0 %v292
    %v444 = vpop.f32.mrf.mxu0
    %v445 = vadd.f32 %v130, %v444
    %v446 = vpop.f32.mrf.mxu0
    %v447 = vadd.f32 %v130, %v446
    %448 = vmatmul.bf16.gmra.mxu0 %v295
    %v449 = vpop.f32.mrf.mxu0
    %v450 = vadd.f32 %v130, %v449
    %v451 = vpop.f32.mrf.mxu0
    %v452 = vadd.f32 %v130, %v451
    %453 = vmatmul.bf16.gmra.mxu0 %v298
    %v454 = vpop.f32.mrf.mxu0
    %v455 = vadd.f32 %v130, %v454
    %v456 = vpop.f32.mrf.mxu0
    %v457 = vadd.f32 %v130, %v456
    %458 = vmatmul.bf16.gmra.mxu0 %v301
    %v459 = vpop.f32.mrf.mxu0
    %v460 = vadd.f32 %v130, %v459
    %v461 = vpop.f32.mrf.mxu0
    %v462 = vadd.f32 %v130, %v461
    %463 = vmatmul.bf16.gmra.mxu0 %v304
    %v464 = vpop.f32.mrf.mxu0
    %v465 = vadd.f32 %v130, %v464
    %v466 = vpop.f32.mrf.mxu0
    %v467 = vadd.f32 %v130, %v466
    %468 = vmatmul.bf16.gmra.mxu0 %v307
    %v469 = vpop.f32.mrf.mxu0
    %v470 = vadd.f32 %v130, %v469
    %v471 = vpop.f32.mrf.mxu0
    %v472 = vadd.f32 %v130, %v471
    %473 = vmatmul.bf16.gmra.mxu0 %v310
    %v474 = vpop.f32.mrf.mxu0
    %v475 = vadd.f32 %v130, %v474
    %v476 = vpop.f32.mrf.mxu0
    %v477 = vadd.f32 %v130, %v476
    %478 = vmatmul.bf16.gmra.mxu0 %v313
    %v479 = vpop.f32.mrf.mxu0
    %v480 = vadd.f32 %v130, %v479
    %v481 = vpop.f32.mrf.mxu0
    %v482 = vadd.f32 %v130, %v481
    %483 = vdwg.mxu0
    %484 = vmatpush.bf16.msra.mxu0 0
    %485 = vmatpush.bf16.msra.mxu0 0
    %486 = vmatpush.bf16.msra.mxu0 0
    %487 = vmatpush.bf16.msra.mxu0 0
    %488 = vmatpush.bf16.msra.mxu0 %v199
    %489 = vmatpush.bf16.msra.mxu0 %v195
    %490 = vmatpush.bf16.msra.mxu0 %v191
    %491 = vmatpush.bf16.msra.mxu0 %v187
    %492 = vmatmul.bf16.gmra.mxu0 %v220
    %v493 = vpop.f32.mrf.mxu0
    %v494 = vadd.f32 %v131, %v493
    %v495 = vpop.f32.mrf.mxu0
    %v496 = vadd.f32 %v131, %v495
    %497 = vmatmul.bf16.gmra.mxu0 %v223
    %v498 = vpop.f32.mrf.mxu0
    %v499 = vadd.f32 %v131, %v498
    %v500 = vpop.f32.mrf.mxu0
    %v501 = vadd.f32 %v131, %v500
    %502 = vmatmul.bf16.gmra.mxu0 %v226
    %v503 = vpop.f32.mrf.mxu0
    %v504 = vadd.f32 %v131, %v503
    %v505 = vpop.f32.mrf.mxu0
    %v506 = vadd.f32 %v131, %v505
    %507 = vmatmul.bf16.gmra.mxu0 %v229
    %v508 = vpop.f32.mrf.mxu0
    %v509 = vadd.f32 %v131, %v508
    %v510 = vpop.f32.mrf.mxu0
    %v511 = vadd.f32 %v131, %v510
    %512 = vmatmul.bf16.gmra.mxu0 %v232
    %v513 = vpop.f32.mrf.mxu0
    %v514 = vadd.f32 %v131, %v513
    %v515 = vpop.f32.mrf.mxu0
    %v516 = vadd.f32 %v131, %v515
    %517 = vmatmul.bf16.gmra.mxu0 %v235
    %v518 = vpop.f32.mrf.mxu0
    %v519 = vadd.f32 %v131, %v518
    %v520 = vpop.f32.mrf.mxu0
    %v521 = vadd.f32 %v131, %v520
    %522 = vmatmul.bf16.gmra.mxu0 %v238
    %v523 = vpop.f32.mrf.mxu0
    %v524 = vadd.f32 %v131, %v523
    %v525 = vpop.f32.mrf.mxu0
    %v526 = vadd.f32 %v131, %v525
    %527 = vmatmul.bf16.gmra.mxu0 %v241
    %v528 = vpop.f32.mrf.mxu0
    %v529 = vadd.f32 %v131, %v528
    %v530 = vpop.f32.mrf.mxu0
    %v531 = vadd.f32 %v131, %v530
    %532 = vmatmul.bf16.gmra.mxu0 %v244
    %v533 = vpop.f32.mrf.mxu0
    %v534 = vadd.f32 %v131, %v533
    %v535 = vpop.f32.mrf.mxu0
    %v536 = vadd.f32 %v131, %v535
    %537 = vmatmul.bf16.gmra.mxu0 %v247
    %v538 = vpop.f32.mrf.mxu0
    %v539 = vadd.f32 %v131, %v538
    %v540 = vpop.f32.mrf.mxu0
    %v541 = vadd.f32 %v131, %v540
    %542 = vmatmul.bf16.gmra.mxu0 %v250
    %v543 = vpop.f32.mrf.mxu0
    %v544 = vadd.f32 %v131, %v543
    %v545 = vpop.f32.mrf.mxu0
    %v546 = vadd.f32 %v131, %v545
    %547 = vmatmul.bf16.gmra.mxu0 %v253
    %v548 = vpop.f32.mrf.mxu0
    %v549 = vadd.f32 %v131, %v548
    %v550 = vpop.f32.mrf.mxu0
    %v551 = vadd.f32 %v131, %v550
    %552 = vmatmul.bf16.gmra.mxu0 %v256
    %v553 = vpop.f32.mrf.mxu0
    %v554 = vadd.f32 %v131, %v553
    %v555 = vpop.f32.mrf.mxu0
    %v556 = vadd.f32 %v131, %v555
    %557 = vmatmul.bf16.gmra.mxu0 %v259
    %v558 = vpop.f32.mrf.mxu0
    %v559 = vadd.f32 %v131, %v558
    %v560 = vpop.f32.mrf.mxu0
    %v561 = vadd.f32 %v131, %v560
    %562 = vmatmul.bf16.gmra.mxu0 %v262
    %v563 = vpop.f32.mrf.mxu0
    %v564 = vadd.f32 %v131, %v563
    %v565 = vpop.f32.mrf.mxu0
    %v566 = vadd.f32 %v131, %v565
    %567 = vmatmul.bf16.gmra.mxu0 %v265
    %v568 = vpop.f32.mrf.mxu0
    %v569 = vadd.f32 %v131, %v568
    %v570 = vpop.f32.mrf.mxu0
    %v571 = vadd.f32 %v131, %v570
    %572 = vmatmul.bf16.gmra.mxu0 %v268
    %v573 = vpop.f32.mrf.mxu0
    %v574 = vadd.f32 %v131, %v573
    %v575 = vpop.f32.mrf.mxu0
    %v576 = vadd.f32 %v131, %v575
    %577 = vmatmul.bf16.gmra.mxu0 %v271
    %v578 = vpop.f32.mrf.mxu0
    %v579 = vadd.f32 %v131, %v578
    %v580 = vpop.f32.mrf.mxu0
    %v581 = vadd.f32 %v131, %v580
    %582 = vmatmul.bf16.gmra.mxu0 %v274
    %v583 = vpop.f32.mrf.mxu0
    %v584 = vadd.f32 %v131, %v583
    %v585 = vpop.f32.mrf.mxu0
    %v586 = vadd.f32 %v131, %v585
    %587 = vmatmul.bf16.gmra.mxu0 %v277
    %v588 = vpop.f32.mrf.mxu0
    %v589 = vadd.f32 %v131, %v588
    %v590 = vpop.f32.mrf.mxu0
    %v591 = vadd.f32 %v131, %v590
    %592 = vmatmul.bf16.gmra.mxu0 %v280
    %v593 = vpop.f32.mrf.mxu0
    %v594 = vadd.f32 %v131, %v593
    %v595 = vpop.f32.mrf.mxu0
    %v596 = vadd.f32 %v131, %v595
    %597 = vmatmul.bf16.gmra.mxu0 %v283
    %v598 = vpop.f32.mrf.mxu0
    %v599 = vadd.f32 %v131, %v598
    %v600 = vpop.f32.mrf.mxu0
    %v601 = vadd.f32 %v131, %v600
    %602 = vmatmul.bf16.gmra.mxu0 %v286
    %v603 = vpop.f32.mrf.mxu0
    %v604 = vadd.f32 %v131, %v603
    %v605 = vpop.f32.mrf.mxu0
    %v606 = vadd.f32 %v131, %v605
    %607 = vmatmul.bf16.gmra.mxu0 %v289
    %v608 = vpop.f32.mrf.mxu0
    %v609 = vadd.f32 %v131, %v608
    %v610 = vpop.f32.mrf.mxu0
    %v611 = vadd.f32 %v131, %v610
    %612 = vmatmul.bf16.gmra.mxu0 %v292
    %v613 = vpop.f32.mrf.mxu0
    %v614 = vadd.f32 %v131, %v613
    %v615 = vpop.f32.mrf.mxu0
    %v616 = vadd.f32 %v131, %v615
    %617 = vmatmul.bf16.gmra.mxu0 %v295
    %v618 = vpop.f32.mrf.mxu0
    %v619 = vadd.f32 %v131, %v618
    %v620 = vpop.f32.mrf.mxu0
    %v621 = vadd.f32 %v131, %v620
    %622 = vmatmul.bf16.gmra.mxu0 %v298
    %v623 = vpop.f32.mrf.mxu0
    %v624 = vadd.f32 %v131, %v623
    %v625 = vpop.f32.mrf.mxu0
    %v626 = vadd.f32 %v131, %v625
    %627 = vmatmul.bf16.gmra.mxu0 %v301
    %v628 = vpop.f32.mrf.mxu0
    %v629 = vadd.f32 %v131, %v628
    %v630 = vpop.f32.mrf.mxu0
    %v631 = vadd.f32 %v131, %v630
    %632 = vmatmul.bf16.gmra.mxu0 %v304
    %v633 = vpop.f32.mrf.mxu0
    %v634 = vadd.f32 %v131, %v633
    %v635 = vpop.f32.mrf.mxu0
    %v636 = vadd.f32 %v131, %v635
    %637 = vmatmul.bf16.gmra.mxu0 %v307
    %v638 = vpop.f32.mrf.mxu0
    %v639 = vadd.f32 %v131, %v638
    %v640 = vpop.f32.mrf.mxu0
    %v641 = vadd.f32 %v131, %v640
    %642 = vmatmul.bf16.gmra.mxu0 %v310
    %v643 = vpop.f32.mrf.mxu0
    %v644 = vadd.f32 %v131, %v643
    %v645 = vpop.f32.mrf.mxu0
    %v646 = vadd.f32 %v131, %v645
    %647 = vmatmul.bf16.gmra.mxu0 %v313
    %v648 = vpop.f32.mrf.mxu0
    %v649 = vadd.f32 %v131, %v648
    %v650 = vpop.f32.mrf.mxu0
    %v651 = vadd.f32 %v131, %v650
    %652 = vdwg.mxu0
    %653 = vmatpush.bf16.msra.mxu0 0
    %654 = vmatpush.bf16.msra.mxu0 0
    %655 = vmatpush.bf16.msra.mxu0 0
    %656 = vmatpush.bf16.msra.mxu0 0
    %657 = vmatpush.bf16.msra.mxu0 %v200
    %658 = vmatpush.bf16.msra.mxu0 %v196
    %659 = vmatpush.bf16.msra.mxu0 %v192
    %660 = vmatpush.bf16.msra.mxu0 %v188
    %661 = vmatmul.bf16.gmra.mxu0 %v220
    %v662 = vpop.f32.mrf.mxu0
    %v663 = vadd.f32 %v132, %v662
    %v664 = vpop.f32.mrf.mxu0
    %v665 = vadd.f32 %v132, %v664
    %666 = vmatmul.bf16.gmra.mxu0 %v223
    %v667 = vpop.f32.mrf.mxu0
    %v668 = vadd.f32 %v132, %v667
    %v669 = vpop.f32.mrf.mxu0
    %v670 = vadd.f32 %v132, %v669
    %671 = vmatmul.bf16.gmra.mxu0 %v226
    %v672 = vpop.f32.mrf.mxu0
    %v673 = vadd.f32 %v132, %v672
    %v674 = vpop.f32.mrf.mxu0
    %v675 = vadd.f32 %v132, %v674
    %676 = vmatmul.bf16.gmra.mxu0 %v229
    %v677 = vpop.f32.mrf.mxu0
    %v678 = vadd.f32 %v132, %v677
    %v679 = vpop.f32.mrf.mxu0
    %v680 = vadd.f32 %v132, %v679
    %681 = vmatmul.bf16.gmra.mxu0 %v232
    %v682 = vpop.f32.mrf.mxu0
    %v683 = vadd.f32 %v132, %v682
    %v684 = vpop.f32.mrf.mxu0
    %v685 = vadd.f32 %v132, %v684
    %686 = vmatmul.bf16.gmra.mxu0 %v235
    %v687 = vpop.f32.mrf.mxu0
    %v688 = vadd.f32 %v132, %v687
    %v689 = vpop.f32.mrf.mxu0
    %v690 = vadd.f32 %v132, %v689
    %691 = vmatmul.bf16.gmra.mxu0 %v238
    %v692 = vpop.f32.mrf.mxu0
    %v693 = vadd.f32 %v132, %v692
    %v694 = vpop.f32.mrf.mxu0
    %v695 = vadd.f32 %v132, %v694
    %696 = vmatmul.bf16.gmra.mxu0 %v241
    %v697 = vpop.f32.mrf.mxu0
    %v698 = vadd.f32 %v132, %v697
    %v699 = vpop.f32.mrf.mxu0
    %v700 = vadd.f32 %v132, %v699
    %701 = vmatmul.bf16.gmra.mxu0 %v244
    %v702 = vpop.f32.mrf.mxu0
    %v703 = vadd.f32 %v132, %v702
    %v704 = vpop.f32.mrf.mxu0
    %v705 = vadd.f32 %v132, %v704
    %706 = vmatmul.bf16.gmra.mxu0 %v247
    %v707 = vpop.f32.mrf.mxu0
    %v708 = vadd.f32 %v132, %v707
    %v709 = vpop.f32.mrf.mxu0
    %v710 = vadd.f32 %v132, %v709
    %711 = vmatmul.bf16.gmra.mxu0 %v250
    %v712 = vpop.f32.mrf.mxu0
    %v713 = vadd.f32 %v132, %v712
    %v714 = vpop.f32.mrf.mxu0
    %v715 = vadd.f32 %v132, %v714
    %716 = vmatmul.bf16.gmra.mxu0 %v253
    %v717 = vpop.f32.mrf.mxu0
    %v718 = vadd.f32 %v132, %v717
    %v719 = vpop.f32.mrf.mxu0
    %v720 = vadd.f32 %v132, %v719
    %721 = vmatmul.bf16.gmra.mxu0 %v256
    %v722 = vpop.f32.mrf.mxu0
    %v723 = vadd.f32 %v132, %v722
    %v724 = vpop.f32.mrf.mxu0
    %v725 = vadd.f32 %v132, %v724
    %726 = vmatmul.bf16.gmra.mxu0 %v259
    %v727 = vpop.f32.mrf.mxu0
    %v728 = vadd.f32 %v132, %v727
    %v729 = vpop.f32.mrf.mxu0
    %v730 = vadd.f32 %v132, %v729
    %731 = vmatmul.bf16.gmra.mxu0 %v262
    %v732 = vpop.f32.mrf.mxu0
    %v733 = vadd.f32 %v132, %v732
    %v734 = vpop.f32.mrf.mxu0
    %v735 = vadd.f32 %v132, %v734
    %736 = vmatmul.bf16.gmra.mxu0 %v265
    %v737 = vpop.f32.mrf.mxu0
    %v738 = vadd.f32 %v132, %v737
    %v739 = vpop.f32.mrf.mxu0
    %v740 = vadd.f32 %v132, %v739
    %741 = vmatmul.bf16.gmra.mxu0 %v268
    %v742 = vpop.f32.mrf.mxu0
    %v743 = vadd.f32 %v132, %v742
    %v744 = vpop.f32.mrf.mxu0
    %v745 = vadd.f32 %v132, %v744
    %746 = vmatmul.bf16.gmra.mxu0 %v271
    %v747 = vpop.f32.mrf.mxu0
    %v748 = vadd.f32 %v132, %v747
    %v749 = vpop.f32.mrf.mxu0
    %v750 = vadd.f32 %v132, %v749
    %751 = vmatmul.bf16.gmra.mxu0 %v274
    %v752 = vpop.f32.mrf.mxu0
    %v753 = vadd.f32 %v132, %v752
    %v754 = vpop.f32.mrf.mxu0
    %v755 = vadd.f32 %v132, %v754
    %756 = vmatmul.bf16.gmra.mxu0 %v277
    %v757 = vpop.f32.mrf.mxu0
    %v758 = vadd.f32 %v132, %v757
    %v759 = vpop.f32.mrf.mxu0
    %v760 = vadd.f32 %v132, %v759
    %761 = vmatmul.bf16.gmra.mxu0 %v280
    %v762 = vpop.f32.mrf.mxu0
    %v763 = vadd.f32 %v132, %v762
    %v764 = vpop.f32.mrf.mxu0
    %v765 = vadd.f32 %v132, %v764
    %766 = vmatmul.bf16.gmra.mxu0 %v283
    %v767 = vpop.f32.mrf.mxu0
    %v768 = vadd.f32 %v132, %v767
    %v769 = vpop.f32.mrf.mxu0
    %v770 = vadd.f32 %v132, %v769
    %771 = vmatmul.bf16.gmra.mxu0 %v286
    %v772 = vpop.f32.mrf.mxu0
    %v773 = vadd.f32 %v132, %v772
    %v774 = vpop.f32.mrf.mxu0
    %v775 = vadd.f32 %v132, %v774
    %776 = vmatmul.bf16.gmra.mxu0 %v289
    %v777 = vpop.f32.mrf.mxu0
    %v778 = vadd.f32 %v132, %v777
    %v779 = vpop.f32.mrf.mxu0
    %v780 = vadd.f32 %v132, %v779
    %781 = vmatmul.bf16.gmra.mxu0 %v292
    %v782 = vpop.f32.mrf.mxu0
    %v783 = vadd.f32 %v132, %v782
    %v784 = vpop.f32.mrf.mxu0
    %v785 = vadd.f32 %v132, %v784
    %786 = vmatmul.bf16.gmra.mxu0 %v295
    %v787 = vpop.f32.mrf.mxu0
    %v788 = vadd.f32 %v132, %v787
    %v789 = vpop.f32.mrf.mxu0
    %v790 = vadd.f32 %v132, %v789
    %791 = vmatmul.bf16.gmra.mxu0 %v298
    %v792 = vpop.f32.mrf.mxu0
    %v793 = vadd.f32 %v132, %v792
    %v794 = vpop.f32.mrf.mxu0
    %v795 = vadd.f32 %v132, %v794
    %796 = vmatmul.bf16.gmra.mxu0 %v301
    %v797 = vpop.f32.mrf.mxu0
    %v798 = vadd.f32 %v132, %v797
    %v799 = vpop.f32.mrf.mxu0
    %v800 = vadd.f32 %v132, %v799
    %801 = vmatmul.bf16.gmra.mxu0 %v304
    %v802 = vpop.f32.mrf.mxu0
    %v803 = vadd.f32 %v132, %v802
    %v804 = vpop.f32.mrf.mxu0
    %v805 = vadd.f32 %v132, %v804
    %806 = vmatmul.bf16.gmra.mxu0 %v307
    %v807 = vpop.f32.mrf.mxu0
    %v808 = vadd.f32 %v132, %v807
    %v809 = vpop.f32.mrf.mxu0
    %v810 = vadd.f32 %v132, %v809
    %811 = vmatmul.bf16.gmra.mxu0 %v310
    %v812 = vpop.f32.mrf.mxu0
    %v813 = vadd.f32 %v132, %v812
    %v814 = vpop.f32.mrf.mxu0
    %v815 = vadd.f32 %v132, %v814
    %816 = vmatmul.bf16.gmra.mxu0 %v313
    %v817 = vpop.f32.mrf.mxu0
    %v818 = vadd.f32 %v132, %v817
    %v819 = vpop.f32.mrf.mxu0
    %v820 = vadd.f32 %v132, %v819
    %821 = vdwg.mxu0
    %822 = vmatpush.bf16.msra.mxu0 0
    %823 = vmatpush.bf16.msra.mxu0 0
    %824 = vmatpush.bf16.msra.mxu0 0
    %825 = vmatpush.bf16.msra.mxu0 0
    %826 = vmatpush.bf16.msra.mxu0 %v201
    %827 = vmatpush.bf16.msra.mxu0 %v197
    %828 = vmatpush.bf16.msra.mxu0 %v193
    %829 = vmatpush.bf16.msra.mxu0 %v189
    %830 = vmatmul.bf16.gmra.mxu0 %v220
    %v831 = vpop.f32.mrf.mxu0
    %v832 = vadd.f32 %v133, %v831
    %v833 = vpop.f32.mrf.mxu0
    %v834 = vadd.f32 %v133, %v833
    %835 = vmatmul.bf16.gmra.mxu0 %v223
    %v836 = vpop.f32.mrf.mxu0
    %v837 = vadd.f32 %v133, %v836
    %v838 = vpop.f32.mrf.mxu0
    %v839 = vadd.f32 %v133, %v838
    %840 = vmatmul.bf16.gmra.mxu0 %v226
    %v841 = vpop.f32.mrf.mxu0
    %v842 = vadd.f32 %v133, %v841
    %v843 = vpop.f32.mrf.mxu0
    %v844 = vadd.f32 %v133, %v843
    %845 = vmatmul.bf16.gmra.mxu0 %v229
    %v846 = vpop.f32.mrf.mxu0
    %v847 = vadd.f32 %v133, %v846
    %v848 = vpop.f32.mrf.mxu0
    %v849 = vadd.f32 %v133, %v848
    %850 = vmatmul.bf16.gmra.mxu0 %v232
    %v851 = vpop.f32.mrf.mxu0
    %v852 = vadd.f32 %v133, %v851
    %v853 = vpop.f32.mrf.mxu0
    %v854 = vadd.f32 %v133, %v853
    %855 = vmatmul.bf16.gmra.mxu0 %v235
    %v856 = vpop.f32.mrf.mxu0
    %v857 = vadd.f32 %v133, %v856
    %v858 = vpop.f32.mrf.mxu0
    %v859 = vadd.f32 %v133, %v858
    %860 = vmatmul.bf16.gmra.mxu0 %v238
    %v861 = vpop.f32.mrf.mxu0
    %v862 = vadd.f32 %v133, %v861
    %v863 = vpop.f32.mrf.mxu0
    %v864 = vadd.f32 %v133, %v863
    %865 = vmatmul.bf16.gmra.mxu0 %v241
    %v866 = vpop.f32.mrf.mxu0
    %v867 = vadd.f32 %v133, %v866
    %v868 = vpop.f32.mrf.mxu0
    %v869 = vadd.f32 %v133, %v868
    %870 = vmatmul.bf16.gmra.mxu0 %v244
    %v871 = vpop.f32.mrf.mxu0
    %v872 = vadd.f32 %v133, %v871
    %v873 = vpop.f32.mrf.mxu0
    %v874 = vadd.f32 %v133, %v873
    %875 = vmatmul.bf16.gmra.mxu0 %v247
    %v876 = vpop.f32.mrf.mxu0
    %v877 = vadd.f32 %v133, %v876
    %v878 = vpop.f32.mrf.mxu0
    %v879 = vadd.f32 %v133, %v878
    %880 = vmatmul.bf16.gmra.mxu0 %v250
    %v881 = vpop.f32.mrf.mxu0
    %v882 = vadd.f32 %v133, %v881
    %v883 = vpop.f32.mrf.mxu0
    %v884 = vadd.f32 %v133, %v883
    %885 = vmatmul.bf16.gmra.mxu0 %v253
    %v886 = vpop.f32.mrf.mxu0
    %v887 = vadd.f32 %v133, %v886
    %v888 = vpop.f32.mrf.mxu0
    %v889 = vadd.f32 %v133, %v888
    %890 = vmatmul.bf16.gmra.mxu0 %v256
    %v891 = vpop.f32.mrf.mxu0
    %v892 = vadd.f32 %v133, %v891
    %v893 = vpop.f32.mrf.mxu0
    %v894 = vadd.f32 %v133, %v893
    %895 = vmatmul.bf16.gmra.mxu0 %v259
    %v896 = vpop.f32.mrf.mxu0
    %v897 = vadd.f32 %v133, %v896
    %v898 = vpop.f32.mrf.mxu0
    %v899 = vadd.f32 %v133, %v898
    %900 = vmatmul.bf16.gmra.mxu0 %v262
    %v901 = vpop.f32.mrf.mxu0
    %v902 = vadd.f32 %v133, %v901
    %v903 = vpop.f32.mrf.mxu0
    %v904 = vadd.f32 %v133, %v903
    %905 = vmatmul.bf16.gmra.mxu0 %v265
    %v906 = vpop.f32.mrf.mxu0
    %v907 = vadd.f32 %v133, %v906
    %v908 = vpop.f32.mrf.mxu0
    %v909 = vadd.f32 %v133, %v908
    %910 = vmatmul.bf16.gmra.mxu0 %v268
    %v911 = vpop.f32.mrf.mxu0
    %v912 = vadd.f32 %v133, %v911
    %v913 = vpop.f32.mrf.mxu0
    %v914 = vadd.f32 %v133, %v913
    %915 = vmatmul.bf16.gmra.mxu0 %v271
    %v916 = vpop.f32.mrf.mxu0
    %v917 = vadd.f32 %v133, %v916
    %v918 = vpop.f32.mrf.mxu0
    %v919 = vadd.f32 %v133, %v918
    %920 = vmatmul.bf16.gmra.mxu0 %v274
    %v921 = vpop.f32.mrf.mxu0
    %v922 = vadd.f32 %v133, %v921
    %v923 = vpop.f32.mrf.mxu0
    %v924 = vadd.f32 %v133, %v923
    %925 = vmatmul.bf16.gmra.mxu0 %v277
    %v926 = vpop.f32.mrf.mxu0
    %v927 = vadd.f32 %v133, %v926
    %v928 = vpop.f32.mrf.mxu0
    %v929 = vadd.f32 %v133, %v928
    %930 = vmatmul.bf16.gmra.mxu0 %v280
    %v931 = vpop.f32.mrf.mxu0
    %v932 = vadd.f32 %v133, %v931
    %v933 = vpop.f32.mrf.mxu0
    %v934 = vadd.f32 %v133, %v933
    %935 = vmatmul.bf16.gmra.mxu0 %v283
    %v936 = vpop.f32.mrf.mxu0
    %v937 = vadd.f32 %v133, %v936
    %v938 = vpop.f32.mrf.mxu0
    %v939 = vadd.f32 %v133, %v938
    %940 = vmatmul.bf16.gmra.mxu0 %v286
    %v941 = vpop.f32.mrf.mxu0
    %v942 = vadd.f32 %v133, %v941
    %v943 = vpop.f32.mrf.mxu0
    %v944 = vadd.f32 %v133, %v943
    %945 = vmatmul.bf16.gmra.mxu0 %v289
    %v946 = vpop.f32.mrf.mxu0
    %v947 = vadd.f32 %v133, %v946
    %v948 = vpop.f32.mrf.mxu0
    %v949 = vadd.f32 %v133, %v948
    %950 = vmatmul.bf16.gmra.mxu0 %v292
    %v951 = vpop.f32.mrf.mxu0
    %v952 = vadd.f32 %v133, %v951
    %v953 = vpop.f32.mrf.mxu0
    %v954 = vadd.f32 %v133, %v953
    %955 = vmatmul.bf16.gmra.mxu0 %v295
    %v956 = vpop.f32.mrf.mxu0
    %v957 = vadd.f32 %v133, %v956
    %v958 = vpop.f32.mrf.mxu0
    %v959 = vadd.f32 %v133, %v958
    %960 = vmatmul.bf16.gmra.mxu0 %v298
    %v961 = vpop.f32.mrf.mxu0
    %v962 = vadd.f32 %v133, %v961
    %v963 = vpop.f32.mrf.mxu0
    %v964 = vadd.f32 %v133, %v963
    %965 = vmatmul.bf16.gmra.mxu0 %v301
    %v966 = vpop.f32.mrf.mxu0
    %v967 = vadd.f32 %v133, %v966
    %v968 = vpop.f32.mrf.mxu0
    %v969 = vadd.f32 %v133, %v968
    %970 = vmatmul.bf16.gmra.mxu0 %v304
    %v971 = vpop.f32.mrf.mxu0
    %v972 = vadd.f32 %v133, %v971
    %v973 = vpop.f32.mrf.mxu0
    %v974 = vadd.f32 %v133, %v973
    %975 = vmatmul.bf16.gmra.mxu0 %v307
    %v976 = vpop.f32.mrf.mxu0
    %v977 = vadd.f32 %v133, %v976
    %v978 = vpop.f32.mrf.mxu0
    %v979 = vadd.f32 %v133, %v978
    %980 = vmatmul.bf16.gmra.mxu0 %v310
    %v981 = vpop.f32.mrf.mxu0
    %v982 = vadd.f32 %v133, %v981
    %v983 = vpop.f32.mrf.mxu0
    %v984 = vadd.f32 %v133, %v983
    %985 = vmatmul.bf16.gmra.mxu0 %v313
    %v986 = vpop.f32.mrf.mxu0
    %v987 = vadd.f32 %v133, %v986
    %v988 = vpop.f32.mrf.mxu0
    %v989 = vadd.f32 %v133, %v988
    %990 = vdwg.mxu0
    %v991 = vmax.f32 %v325, 0.0
    %v992 = vmax.f32 %v494, 0.0
    %v993 = vmax.f32 %v663, 0.0
    %v994 = vmax.f32 %v832, 0.0
    %v995 = vmax.f32 %v327, 0.0
    %v996 = vmax.f32 %v496, 0.0
    %v997 = vmax.f32 %v665, 0.0
    %v998 = vmax.f32 %v834, 0.0
    %v999 = vmax.f32 %v330, 0.0
    %v1000 = vmax.f32 %v499, 0.0
    %v1001 = vmax.f32 %v668, 0.0
    %v1002 = vmax.f32 %v837, 0.0
    %v1003 = vmax.f32 %v332, 0.0
    %v1004 = vmax.f32 %v501, 0.0
    %v1005 = vmax.f32 %v670, 0.0
    %v1006 = vmax.f32 %v839, 0.0
    %v1007 = vmax.f32 %v335, 0.0
    %v1008 = vmax.f32 %v504, 0.0
    %v1009 = vmax.f32 %v673, 0.0
    %v1010 = vmax.f32 %v842, 0.0
    %v1011 = vmax.f32 %v337, 0.0
    %v1012 = vmax.f32 %v506, 0.0
    %v1013 = vmax.f32 %v675, 0.0
    %v1014 = vmax.f32 %v844, 0.0
    %v1015 = vmax.f32 %v340, 0.0
    %v1016 = vmax.f32 %v509, 0.0
    %v1017 = vmax.f32 %v678, 0.0
    %v1018 = vmax.f32 %v847, 0.0
    %v1019 = vmax.f32 %v342, 0.0
    %v1020 = vmax.f32 %v511, 0.0
    %v1021 = vmax.f32 %v680, 0.0
    %v1022 = vmax.f32 %v849, 0.0
    %v1023 = vmax.f32 %v345, 0.0
    %v1024 = vmax.f32 %v514, 0.0
    %v1025 = vmax.f32 %v683, 0.0
    %v1026 = vmax.f32 %v852, 0.0
    %v1027 = vmax.f32 %v347, 0.0
    %v1028 = vmax.f32 %v516, 0.0
    %v1029 = vmax.f32 %v685, 0.0
    %v1030 = vmax.f32 %v854, 0.0
    %v1031 = vmax.f32 %v350, 0.0
    %v1032 = vmax.f32 %v519, 0.0
    %v1033 = vmax.f32 %v688, 0.0
    %v1034 = vmax.f32 %v857, 0.0
    %v1035 = vmax.f32 %v352, 0.0
    %v1036 = vmax.f32 %v521, 0.0
    %v1037 = vmax.f32 %v690, 0.0
    %v1038 = vmax.f32 %v859, 0.0
    %v1039 = vmax.f32 %v355, 0.0
    %v1040 = vmax.f32 %v524, 0.0
    %v1041 = vmax.f32 %v693, 0.0
    %v1042 = vmax.f32 %v862, 0.0
    %v1043 = vmax.f32 %v357, 0.0
    %v1044 = vmax.f32 %v526, 0.0
    %v1045 = vmax.f32 %v695, 0.0
    %v1046 = vmax.f32 %v864, 0.0
    %v1047 = vmax.f32 %v360, 0.0
    %v1048 = vmax.f32 %v529, 0.0
    %v1049 = vmax.f32 %v698, 0.0
    %v1050 = vmax.f32 %v867, 0.0
    %v1051 = vmax.f32 %v362, 0.0
    %v1052 = vmax.f32 %v531, 0.0
    %v1053 = vmax.f32 %v700, 0.0
    %v1054 = vmax.f32 %v869, 0.0
    %v1055 = vmax.f32 %v365, 0.0
    %v1056 = vmax.f32 %v534, 0.0
    %v1057 = vmax.f32 %v703, 0.0
    %v1058 = vmax.f32 %v872, 0.0
    %v1059 = vmax.f32 %v367, 0.0
    %v1060 = vmax.f32 %v536, 0.0
    %v1061 = vmax.f32 %v705, 0.0
    %v1062 = vmax.f32 %v874, 0.0
    %v1063 = vmax.f32 %v370, 0.0
    %v1064 = vmax.f32 %v539, 0.0
    %v1065 = vmax.f32 %v708, 0.0
    %v1066 = vmax.f32 %v877, 0.0
    %v1067 = vmax.f32 %v372, 0.0
    %v1068 = vmax.f32 %v541, 0.0
    %v1069 = vmax.f32 %v710, 0.0
    %v1070 = vmax.f32 %v879, 0.0
    %v1071 = vmax.f32 %v375, 0.0
    %v1072 = vmax.f32 %v544, 0.0
    %v1073 = vmax.f32 %v713, 0.0
    %v1074 = vmax.f32 %v882, 0.0
    %v1075 = vmax.f32 %v377, 0.0
    %v1076 = vmax.f32 %v546, 0.0
    %v1077 = vmax.f32 %v715, 0.0
    %v1078 = vmax.f32 %v884, 0.0
    %v1079 = vmax.f32 %v380, 0.0
    %v1080 = vmax.f32 %v549, 0.0
    %v1081 = vmax.f32 %v718, 0.0
    %v1082 = vmax.f32 %v887, 0.0
    %v1083 = vmax.f32 %v382, 0.0
    %v1084 = vmax.f32 %v551, 0.0
    %v1085 = vmax.f32 %v720, 0.0
    %v1086 = vmax.f32 %v889, 0.0
    %v1087 = vmax.f32 %v385, 0.0
    %v1088 = vmax.f32 %v554, 0.0
    %v1089 = vmax.f32 %v723, 0.0
    %v1090 = vmax.f32 %v892, 0.0
    %v1091 = vmax.f32 %v387, 0.0
    %v1092 = vmax.f32 %v556, 0.0
    %v1093 = vmax.f32 %v725, 0.0
    %v1094 = vmax.f32 %v894, 0.0
    %v1095 = vmax.f32 %v390, 0.0
    %v1096 = vmax.f32 %v559, 0.0
    %v1097 = vmax.f32 %v728, 0.0
    %v1098 = vmax.f32 %v897, 0.0
    %v1099 = vmax.f32 %v392, 0.0
    %v1100 = vmax.f32 %v561, 0.0
    %v1101 = vmax.f32 %v730, 0.0
    %v1102 = vmax.f32 %v899, 0.0
    %v1103 = vmax.f32 %v395, 0.0
    %v1104 = vmax.f32 %v564, 0.0
    %v1105 = vmax.f32 %v733, 0.0
    %v1106 = vmax.f32 %v902, 0.0
    %v1107 = vmax.f32 %v397, 0.0
    %v1108 = vmax.f32 %v566, 0.0
    %v1109 = vmax.f32 %v735, 0.0
    %v1110 = vmax.f32 %v904, 0.0
    %v1111 = vmax.f32 %v400, 0.0
    %v1112 = vmax.f32 %v569, 0.0
    %v1113 = vmax.f32 %v738, 0.0
    %v1114 = vmax.f32 %v907, 0.0
    %v1115 = vmax.f32 %v402, 0.0
    %v1116 = vmax.f32 %v571, 0.0
    %v1117 = vmax.f32 %v740, 0.0
    %v1118 = vmax.f32 %v909, 0.0
    %v1119 = vmax.f32 %v405, 0.0
    %v1120 = vmax.f32 %v574, 0.0
    %v1121 = vmax.f32 %v743, 0.0
    %v1122 = vmax.f32 %v912, 0.0
    %v1123 = vmax.f32 %v407, 0.0
    %v1124 = vmax.f32 %v576, 0.0
    %v1125 = vmax.f32 %v745, 0.0
    %v1126 = vmax.f32 %v914, 0.0
    %v1127 = vmax.f32 %v410, 0.0
    %v1128 = vmax.f32 %v579, 0.0
    %v1129 = vmax.f32 %v748, 0.0
    %v1130 = vmax.f32 %v917, 0.0
    %v1131 = vmax.f32 %v412, 0.0
    %v1132 = vmax.f32 %v581, 0.0
    %v1133 = vmax.f32 %v750, 0.0
    %v1134 = vmax.f32 %v919, 0.0
    %v1135 = vmax.f32 %v415, 0.0
    %v1136 = vmax.f32 %v584, 0.0
    %v1137 = vmax.f32 %v753, 0.0
    %v1138 = vmax.f32 %v922, 0.0
    %v1139 = vmax.f32 %v417, 0.0
    %v1140 = vmax.f32 %v586, 0.0
    %v1141 = vmax.f32 %v755, 0.0
    %v1142 = vmax.f32 %v924, 0.0
    %v1143 = vmax.f32 %v420, 0.0
    %v1144 = vmax.f32 %v589, 0.0
    %v1145 = vmax.f32 %v758, 0.0
    %v1146 = vmax.f32 %v927, 0.0
    %v1147 = vmax.f32 %v422, 0.0
    %v1148 = vmax.f32 %v591, 0.0
    %v1149 = vmax.f32 %v760, 0.0
    %v1150 = vmax.f32 %v929, 0.0
    %v1151 = vmax.f32 %v425, 0.0
    %v1152 = vmax.f32 %v594, 0.0
    %v1153 = vmax.f32 %v763, 0.0
    %v1154 = vmax.f32 %v932, 0.0
    %v1155 = vmax.f32 %v427, 0.0
    %v1156 = vmax.f32 %v596, 0.0
    %v1157 = vmax.f32 %v765, 0.0
    %v1158 = vmax.f32 %v934, 0.0
    %v1159 = vmax.f32 %v430, 0.0
    %v1160 = vmax.f32 %v599, 0.0
    %v1161 = vmax.f32 %v768, 0.0
    %v1162 = vmax.f32 %v937, 0.0
    %v1163 = vmax.f32 %v432, 0.0
    %v1164 = vmax.f32 %v601, 0.0
    %v1165 = vmax.f32 %v770, 0.0
    %v1166 = vmax.f32 %v939, 0.0
    %v1167 = vmax.f32 %v435, 0.0
    %v1168 = vmax.f32 %v604, 0.0
    %v1169 = vmax.f32 %v773, 0.0
    %v1170 = vmax.f32 %v942, 0.0
    %v1171 = vmax.f32 %v437, 0.0
    %v1172 = vmax.f32 %v606, 0.0
    %v1173 = vmax.f32 %v775, 0.0
    %v1174 = vmax.f32 %v944, 0.0
    %v1175 = vmax.f32 %v440, 0.0
    %v1176 = vmax.f32 %v609, 0.0
    %v1177 = vmax.f32 %v778, 0.0
    %v1178 = vmax.f32 %v947, 0.0
    %v1179 = vmax.f32 %v442, 0.0
    %v1180 = vmax.f32 %v611, 0.0
    %v1181 = vmax.f32 %v780, 0.0
    %v1182 = vmax.f32 %v949, 0.0
    %v1183 = vmax.f32 %v445, 0.0
    %v1184 = vmax.f32 %v614, 0.0
    %v1185 = vmax.f32 %v783, 0.0
    %v1186 = vmax.f32 %v952, 0.0
    %v1187 = vmax.f32 %v447, 0.0
    %v1188 = vmax.f32 %v616, 0.0
    %v1189 = vmax.f32 %v785, 0.0
    %v1190 = vmax.f32 %v954, 0.0
    %v1191 = vmax.f32 %v450, 0.0
    %v1192 = vmax.f32 %v619, 0.0
    %v1193 = vmax.f32 %v788, 0.0
    %v1194 = vmax.f32 %v957, 0.0
    %v1195 = vmax.f32 %v452, 0.0
    %v1196 = vmax.f32 %v621, 0.0
    %v1197 = vmax.f32 %v790, 0.0
    %v1198 = vmax.f32 %v959, 0.0
    %v1199 = vmax.f32 %v455, 0.0
    %v1200 = vmax.f32 %v624, 0.0
    %v1201 = vmax.f32 %v793, 0.0
    %v1202 = vmax.f32 %v962, 0.0
    %v1203 = vmax.f32 %v457, 0.0
    %v1204 = vmax.f32 %v626, 0.0
    %v1205 = vmax.f32 %v795, 0.0
    %v1206 = vmax.f32 %v964, 0.0
    %v1207 = vmax.f32 %v460, 0.0
    %v1208 = vmax.f32 %v629, 0.0
    %v1209 = vmax.f32 %v798, 0.0
    %v1210 = vmax.f32 %v967, 0.0
    %v1211 = vmax.f32 %v462, 0.0
    %v1212 = vmax.f32 %v631, 0.0
    %v1213 = vmax.f32 %v800, 0.0
    %v1214 = vmax.f32 %v969, 0.0
    %v1215 = vmax.f32 %v465, 0.0
    %v1216 = vmax.f32 %v634, 0.0
    %v1217 = vmax.f32 %v803, 0.0
    %v1218 = vmax.f32 %v972, 0.0
    %v1219 = vmax.f32 %v467, 0.0
    %v1220 = vmax.f32 %v636, 0.0
    %v1221 = vmax.f32 %v805, 0.0
    %v1222 = vmax.f32 %v974, 0.0
    %v1223 = vmax.f32 %v470, 0.0
    %v1224 = vmax.f32 %v639, 0.0
    %v1225 = vmax.f32 %v808, 0.0
    %v1226 = vmax.f32 %v977, 0.0
    %v1227 = vmax.f32 %v472, 0.0
    %v1228 = vmax.f32 %v641, 0.0
    %v1229 = vmax.f32 %v810, 0.0
    %v1230 = vmax.f32 %v979, 0.0
    %v1231 = vmax.f32 %v475, 0.0
    %v1232 = vmax.f32 %v644, 0.0
    %v1233 = vmax.f32 %v813, 0.0
    %v1234 = vmax.f32 %v982, 0.0
    %v1235 = vmax.f32 %v477, 0.0
    %v1236 = vmax.f32 %v646, 0.0
    %v1237 = vmax.f32 %v815, 0.0
    %v1238 = vmax.f32 %v984, 0.0
    %v1239 = vmax.f32 %v480, 0.0
    %v1240 = vmax.f32 %v649, 0.0
    %v1241 = vmax.f32 %v818, 0.0
    %v1242 = vmax.f32 %v987, 0.0
    %v1243 = vmax.f32 %v482, 0.0
    %v1244 = vmax.f32 %v651, 0.0
    %v1245 = vmax.f32 %v820, 0.0
    %v1246 = vmax.f32 %v989, 0.0
    %1247 = vst [vmem:[#allocation2] sm:$0xff] %v991
    %1248 = vst [vmem:[#allocation2 + $0x8] sm:$0xff] %v992
    %1249 = vst [vmem:[#allocation2 + $0x10] sm:$0xff] %v993
    %1250 = vst [vmem:[#allocation2 + $0x18] sm:$0xff] %v994
    %1251 = vst [vmem:[#allocation2 + $0x20] sm:$0xff] %v995
    %1252 = vst [vmem:[#allocation2 + $0x28] sm:$0xff] %v996
    %1253 = vst [vmem:[#allocation2 + $0x30] sm:$0xff] %v997
    %1254 = vst [vmem:[#allocation2 + $0x38] sm:$0xff] %v998
    %1255 = vst [vmem:[#allocation2 + $0x40] sm:$0xff] %v999
    %1256 = vst [vmem:[#allocation2 + $0x48] sm:$0xff] %v1000
    %1257 = vst [vmem:[#allocation2 + $0x50] sm:$0xff] %v1001
    %1258 = vst [vmem:[#allocation2 + $0x58] sm:$0xff] %v1002
    %1259 = vst [vmem:[#allocation2 + $0x60] sm:$0xff] %v1003
    %1260 = vst [vmem:[#allocation2 + $0x68] sm:$0xff] %v1004
    %1261 = vst [vmem:[#allocation2 + $0x70] sm:$0xff] %v1005
    %1262 = vst [vmem:[#allocation2 + $0x78] sm:$0xff] %v1006
    %1263 = vst [vmem:[#allocation2 + $0x80] sm:$0xff] %v1007
    %1264 = vst [vmem:[#allocation2 + $0x88] sm:$0xff] %v1008
    %1265 = vst [vmem:[#allocation2 + $0x90] sm:$0xff] %v1009
    %1266 = vst [vmem:[#allocation2 + $0x98] sm:$0xff] %v1010
    %1267 = vst [vmem:[#allocation2 + $0xa0] sm:$0xff] %v1011
    %1268 = vst [vmem:[#allocation2 + $0xa8] sm:$0xff] %v1012
    %1269 = vst [vmem:[#allocation2 + $0xb0] sm:$0xff] %v1013
    %1270 = vst [vmem:[#allocation2 + $0xb8] sm:$0xff] %v1014
    %1271 = vst [vmem:[#allocation2 + $0xc0] sm:$0xff] %v1015
    %1272 = vst [vmem:[#allocation2 + $0xc8] sm:$0xff] %v1016
    %1273 = vst [vmem:[#allocation2 + $0xd0] sm:$0xff] %v1017
    %1274 = vst [vmem:[#allocation2 + $0xd8] sm:$0xff] %v1018
    %1275 = vst [vmem:[#allocation2 + $0xe0] sm:$0xff] %v1019
    %1276 = vst [vmem:[#allocation2 + $0xe8] sm:$0xff] %v1020
    %1277 = vst [vmem:[#allocation2 + $0xf0] sm:$0xff] %v1021
    %1278 = vst [vmem:[#allocation2 + $0xf8] sm:$0xff] %v1022
    %1279 = vst [vmem:[#allocation2 + $0x100] sm:$0xff] %v1023
    %1280 = vst [vmem:[#allocation2 + $0x108] sm:$0xff] %v1024
    %1281 = vst [vmem:[#allocation2 + $0x110] sm:$0xff] %v1025
    %1282 = vst [vmem:[#allocation2 + $0x118] sm:$0xff] %v1026
    %1283 = vst [vmem:[#allocation2 + $0x120] sm:$0xff] %v1027
    %1284 = vst [vmem:[#allocation2 + $0x128] sm:$0xff] %v1028
    %1285 = vst [vmem:[#allocation2 + $0x130] sm:$0xff] %v1029
    %1286 = vst [vmem:[#allocation2 + $0x138] sm:$0xff] %v1030
    %1287 = vst [vmem:[#allocation2 + $0x140] sm:$0xff] %v1031
    %1288 = vst [vmem:[#allocation2 + $0x148] sm:$0xff] %v1032
    %1289 = vst [vmem:[#allocation2 + $0x150] sm:$0xff] %v1033
    %1290 = vst [vmem:[#allocation2 + $0x158] sm:$0xff] %v1034
    %1291 = vst [vmem:[#allocation2 + $0x160] sm:$0xff] %v1035
    %1292 = vst [vmem:[#allocation2 + $0x168] sm:$0xff] %v1036
    %1293 = vst [vmem:[#allocation2 + $0x170] sm:$0xff] %v1037
    %1294 = vst [vmem:[#allocation2 + $0x178] sm:$0xff] %v1038
    %1295 = vst [vmem:[#allocation2 + $0x180] sm:$0xff] %v1039
    %1296 = vst [vmem:[#allocation2 + $0x188] sm:$0xff] %v1040
    %1297 = vst [vmem:[#allocation2 + $0x190] sm:$0xff] %v1041
    %1298 = vst [vmem:[#allocation2 + $0x198] sm:$0xff] %v1042
    %1299 = vst [vmem:[#allocation2 + $0x1a0] sm:$0xff] %v1043
    %1300 = vst [vmem:[#allocation2 + $0x1a8] sm:$0xff] %v1044
    %1301 = vst [vmem:[#allocation2 + $0x1b0] sm:$0xff] %v1045
    %1302 = vst [vmem:[#allocation2 + $0x1b8] sm:$0xff] %v1046
    %1303 = vst [vmem:[#allocation2 + $0x1c0] sm:$0xff] %v1047
    %1304 = vst [vmem:[#allocation2 + $0x1c8] sm:$0xff] %v1048
    %1305 = vst [vmem:[#allocation2 + $0x1d0] sm:$0xff] %v1049
    %1306 = vst [vmem:[#allocation2 + $0x1d8] sm:$0xff] %v1050
    %1307 = vst [vmem:[#allocation2 + $0x1e0] sm:$0xff] %v1051
    %1308 = vst [vmem:[#allocation2 + $0x1e8] sm:$0xff] %v1052
    %1309 = vst [vmem:[#allocation2 + $0x1f0] sm:$0xff] %v1053
    %1310 = vst [vmem:[#allocation2 + $0x1f8] sm:$0xff] %v1054
    %1311 = vst [vmem:[#allocation2 + $0x200] sm:$0xff] %v1055
    %1312 = vst [vmem:[#allocation2 + $0x208] sm:$0xff] %v1056
    %1313 = vst [vmem:[#allocation2 + $0x210] sm:$0xff] %v1057
    %1314 = vst [vmem:[#allocation2 + $0x218] sm:$0xff] %v1058
    %1315 = vst [vmem:[#allocation2 + $0x220] sm:$0xff] %v1059
    %1316 = vst [vmem:[#allocation2 + $0x228] sm:$0xff] %v1060
    %1317 = vst [vmem:[#allocation2 + $0x230] sm:$0xff] %v1061
    %1318 = vst [vmem:[#allocation2 + $0x238] sm:$0xff] %v1062
    %1319 = vst [vmem:[#allocation2 + $0x240] sm:$0xff] %v1063
    %1320 = vst [vmem:[#allocation2 + $0x248] sm:$0xff] %v1064
    %1321 = vst [vmem:[#allocation2 + $0x250] sm:$0xff] %v1065
    %1322 = vst [vmem:[#allocation2 + $0x258] sm:$0xff] %v1066
    %1323 = vst [vmem:[#allocation2 + $0x260] sm:$0xff] %v1067
    %1324 = vst [vmem:[#allocation2 + $0x268] sm:$0xff] %v1068
    %1325 = vst [vmem:[#allocation2 + $0x270] sm:$0xff] %v1069
    %1326 = vst [vmem:[#allocation2 + $0x278] sm:$0xff] %v1070
    %1327 = vst [vmem:[#allocation2 + $0x280] sm:$0xff] %v1071
    %1328 = vst [vmem:[#allocation2 + $0x288] sm:$0xff] %v1072
    %1329 = vst [vmem:[#allocation2 + $0x290] sm:$0xff] %v1073
    %1330 = vst [vmem:[#allocation2 + $0x298] sm:$0xff] %v1074
    %1331 = vst [vmem:[#allocation2 + $0x2a0] sm:$0xff] %v1075
    %1332 = vst [vmem:[#allocation2 + $0x2a8] sm:$0xff] %v1076
    %1333 = vst [vmem:[#allocation2 + $0x2b0] sm:$0xff] %v1077
    %1334 = vst [vmem:[#allocation2 + $0x2b8] sm:$0xff] %v1078
    %1335 = vst [vmem:[#allocation2 + $0x2c0] sm:$0xff] %v1079
    %1336 = vst [vmem:[#allocation2 + $0x2c8] sm:$0xff] %v1080
    %1337 = vst [vmem:[#allocation2 + $0x2d0] sm:$0xff] %v1081
    %1338 = vst [vmem:[#allocation2 + $0x2d8] sm:$0xff] %v1082
    %1339 = vst [vmem:[#allocation2 + $0x2e0] sm:$0xff] %v1083
    %1340 = vst [vmem:[#allocation2 + $0x2e8] sm:$0xff] %v1084
    %1341 = vst [vmem:[#allocation2 + $0x2f0] sm:$0xff] %v1085
    %1342 = vst [vmem:[#allocation2 + $0x2f8] sm:$0xff] %v1086
    %1343 = vst [vmem:[#allocation2 + $0x300] sm:$0xff] %v1087
    %1344 = vst [vmem:[#allocation2 + $0x308] sm:$0xff] %v1088
    %1345 = vst [vmem:[#allocation2 + $0x310] sm:$0xff] %v1089
    %1346 = vst [vmem:[#allocation2 + $0x318] sm:$0xff] %v1090
    %1347 = vst [vmem:[#allocation2 + $0x320] sm:$0xff] %v1091
    %1348 = vst [vmem:[#allocation2 + $0x328] sm:$0xff] %v1092
    %1349 = vst [vmem:[#allocation2 + $0x330] sm:$0xff] %v1093
    %1350 = vst [vmem:[#allocation2 + $0x338] sm:$0xff] %v1094
    %1351 = vst [vmem:[#allocation2 + $0x340] sm:$0xff] %v1095
    %1352 = vst [vmem:[#allocation2 + $0x348] sm:$0xff] %v1096
    %1353 = vst [vmem:[#allocation2 + $0x350] sm:$0xff] %v1097
    %1354 = vst [vmem:[#allocation2 + $0x358] sm:$0xff] %v1098
    %1355 = vst [vmem:[#allocation2 + $0x360] sm:$0xff] %v1099
    %1356 = vst [vmem:[#allocation2 + $0x368] sm:$0xff] %v1100
    %1357 = vst [vmem:[#allocation2 + $0x370] sm:$0xff] %v1101
    %1358 = vst [vmem:[#allocation2 + $0x378] sm:$0xff] %v1102
    %1359 = vst [vmem:[#allocation2 + $0x380] sm:$0xff] %v1103
    %1360 = vst [vmem:[#allocation2 + $0x388] sm:$0xff] %v1104
    %1361 = vst [vmem:[#allocation2 + $0x390] sm:$0xff] %v1105
    %1362 = vst [vmem:[#allocation2 + $0x398] sm:$0xff] %v1106
    %1363 = vst [vmem:[#allocation2 + $0x3a0] sm:$0xff] %v1107
    %1364 = vst [vmem:[#allocation2 + $0x3a8] sm:$0xff] %v1108
    %1365 = vst [vmem:[#allocation2 + $0x3b0] sm:$0xff] %v1109
    %1366 = vst [vmem:[#allocation2 + $0x3b8] sm:$0xff] %v1110
    %1367 = vst [vmem:[#allocation2 + $0x3c0] sm:$0xff] %v1111
    %1368 = vst [vmem:[#allocation2 + $0x3c8] sm:$0xff] %v1112
    %1369 = vst [vmem:[#allocation2 + $0x3d0] sm:$0xff] %v1113
    %1370 = vst [vmem:[#allocation2 + $0x3d8] sm:$0xff] %v1114
    %1371 = vst [vmem:[#allocation2 + $0x3e0] sm:$0xff] %v1115
    %1372 = vst [vmem:[#allocation2 + $0x3e8] sm:$0xff] %v1116
    %1373 = vst [vmem:[#allocation2 + $0x3f0] sm:$0xff] %v1117
    %1374 = vst [vmem:[#allocation2 + $0x3f8] sm:$0xff] %v1118
    %1375 = vst [vmem:[#allocation2 + $0x400] sm:$0xff] %v1119
    %1376 = vst [vmem:[#allocation2 + $0x408] sm:$0xff] %v1120
    %1377 = vst [vmem:[#allocation2 + $0x410] sm:$0xff] %v1121
    %1378 = vst [vmem:[#allocation2 + $0x418] sm:$0xff] %v1122
    %1379 = vst [vmem:[#allocation2 + $0x420] sm:$0xff] %v1123
    %1380 = vst [vmem:[#allocation2 + $0x428] sm:$0xff] %v1124
    %1381 = vst [vmem:[#allocation2 + $0x430] sm:$0xff] %v1125
    %1382 = vst [vmem:[#allocation2 + $0x438] sm:$0xff] %v1126
    %1383 = vst [vmem:[#allocation2 + $0x440] sm:$0xff] %v1127
    %1384 = vst [vmem:[#allocation2 + $0x448] sm:$0xff] %v1128
    %1385 = vst [vmem:[#allocation2 + $0x450] sm:$0xff] %v1129
    %1386 = vst [vmem:[#allocation2 + $0x458] sm:$0xff] %v1130
    %1387 = vst [vmem:[#allocation2 + $0x460] sm:$0xff] %v1131
    %1388 = vst [vmem:[#allocation2 + $0x468] sm:$0xff] %v1132
    %1389 = vst [vmem:[#allocation2 + $0x470] sm:$0xff] %v1133
    %1390 = vst [vmem:[#allocation2 + $0x478] sm:$0xff] %v1134
    %1391 = vst [vmem:[#allocation2 + $0x480] sm:$0xff] %v1135
    %1392 = vst [vmem:[#allocation2 + $0x488] sm:$0xff] %v1136
    %1393 = vst [vmem:[#allocation2 + $0x490] sm:$0xff] %v1137
    %1394 = vst [vmem:[#allocation2 + $0x498] sm:$0xff] %v1138
    %1395 = vst [vmem:[#allocation2 + $0x4a0] sm:$0xff] %v1139
    %1396 = vst [vmem:[#allocation2 + $0x4a8] sm:$0xff] %v1140
    %1397 = vst [vmem:[#allocation2 + $0x4b0] sm:$0xff] %v1141
    %1398 = vst [vmem:[#allocation2 + $0x4b8] sm:$0xff] %v1142
    %1399 = vst [vmem:[#allocation2 + $0x4c0] sm:$0xff] %v1143
    %1400 = vst [vmem:[#allocation2 + $0x4c8] sm:$0xff] %v1144
    %1401 = vst [vmem:[#allocation2 + $0x4d0] sm:$0xff] %v1145
    %1402 = vst [vmem:[#allocation2 + $0x4d8] sm:$0xff] %v1146
    %1403 = vst [vmem:[#allocation2 + $0x4e0] sm:$0xff] %v1147
    %1404 = vst [vmem:[#allocation2 + $0x4e8] sm:$0xff] %v1148
    %1405 = vst [vmem:[#allocation2 + $0x4f0] sm:$0xff] %v1149
    %1406 = vst [vmem:[#allocation2 + $0x4f8] sm:$0xff] %v1150
    %1407 = vst [vmem:[#allocation2 + $0x500] sm:$0xff] %v1151
    %1408 = vst [vmem:[#allocation2 + $0x508] sm:$0xff] %v1152
    %1409 = vst [vmem:[#allocation2 + $0x510] sm:$0xff] %v1153
    %1410 = vst [vmem:[#allocation2 + $0x518] sm:$0xff] %v1154
    %1411 = vst [vmem:[#allocation2 + $0x520] sm:$0xff] %v1155
    %1412 = vst [vmem:[#allocation2 + $0x528] sm:$0xff] %v1156
    %1413 = vst [vmem:[#allocation2 + $0x530] sm:$0xff] %v1157
    %1414 = vst [vmem:[#allocation2 + $0x538] sm:$0xff] %v1158
    %1415 = vst [vmem:[#allocation2 + $0x540] sm:$0xff] %v1159
    %1416 = vst [vmem:[#allocation2 + $0x548] sm:$0xff] %v1160
    %1417 = vst [vmem:[#allocation2 + $0x550] sm:$0xff] %v1161
    %1418 = vst [vmem:[#allocation2 + $0x558] sm:$0xff] %v1162
    %1419 = vst [vmem:[#allocation2 + $0x560] sm:$0xff] %v1163
    %1420 = vst [vmem:[#allocation2 + $0x568] sm:$0xff] %v1164
    %1421 = vst [vmem:[#allocation2 + $0x570] sm:$0xff] %v1165
    %1422 = vst [vmem:[#allocation2 + $0x578] sm:$0xff] %v1166
    %1423 = vst [vmem:[#allocation2 + $0x580] sm:$0xff] %v1167
    %1424 = vst [vmem:[#allocation2 + $0x588] sm:$0xff] %v1168
    %1425 = vst [vmem:[#allocation2 + $0x590] sm:$0xff] %v1169
    %1426 = vst [vmem:[#allocation2 + $0x598] sm:$0xff] %v1170
    %1427 = vst [vmem:[#allocation2 + $0x5a0] sm:$0xff] %v1171
    %1428 = vst [vmem:[#allocation2 + $0x5a8] sm:$0xff] %v1172
    %1429 = vst [vmem:[#allocation2 + $0x5b0] sm:$0xff] %v1173
    %1430 = vst [vmem:[#allocation2 + $0x5b8] sm:$0xff] %v1174
    %1431 = vst [vmem:[#allocation2 + $0x5c0] sm:$0xff] %v1175
    %1432 = vst [vmem:[#allocation2 + $0x5c8] sm:$0xff] %v1176
    %1433 = vst [vmem:[#allocation2 + $0x5d0] sm:$0xff] %v1177
    %1434 = vst [vmem:[#allocation2 + $0x5d8] sm:$0xff] %v1178
    %1435 = vst [vmem:[#allocation2 + $0x5e0] sm:$0xff] %v1179
    %1436 = vst [vmem:[#allocation2 + $0x5e8] sm:$0xff] %v1180
    %1437 = vst [vmem:[#allocation2 + $0x5f0] sm:$0xff] %v1181
    %1438 = vst [vmem:[#allocation2 + $0x5f8] sm:$0xff] %v1182
    %1439 = vst [vmem:[#allocation2 + $0x600] sm:$0xff] %v1183
    %1440 = vst [vmem:[#allocation2 + $0x608] sm:$0xff] %v1184
    %1441 = vst [vmem:[#allocation2 + $0x610] sm:$0xff] %v1185
    %1442 = vst [vmem:[#allocation2 + $0x618] sm:$0xff] %v1186
    %1443 = vst [vmem:[#allocation2 + $0x620] sm:$0xff] %v1187
    %1444 = vst [vmem:[#allocation2 + $0x628] sm:$0xff] %v1188
    %1445 = vst [vmem:[#allocation2 + $0x630] sm:$0xff] %v1189
    %1446 = vst [vmem:[#allocation2 + $0x638] sm:$0xff] %v1190
    %1447 = vst [vmem:[#allocation2 + $0x640] sm:$0xff] %v1191
    %1448 = vst [vmem:[#allocation2 + $0x648] sm:$0xff] %v1192
    %1449 = vst [vmem:[#allocation2 + $0x650] sm:$0xff] %v1193
    %1450 = vst [vmem:[#allocation2 + $0x658] sm:$0xff] %v1194
    %1451 = vst [vmem:[#allocation2 + $0x660] sm:$0xff] %v1195
    %1452 = vst [vmem:[#allocation2 + $0x668] sm:$0xff] %v1196
    %1453 = vst [vmem:[#allocation2 + $0x670] sm:$0xff] %v1197
    %1454 = vst [vmem:[#allocation2 + $0x678] sm:$0xff] %v1198
    %1455 = vst [vmem:[#allocation2 + $0x680] sm:$0xff] %v1199
    %1456 = vst [vmem:[#allocation2 + $0x688] sm:$0xff] %v1200
    %1457 = vst [vmem:[#allocation2 + $0x690] sm:$0xff] %v1201
    %1458 = vst [vmem:[#allocation2 + $0x698] sm:$0xff] %v1202
    %1459 = vst [vmem:[#allocation2 + $0x6a0] sm:$0xff] %v1203
    %1460 = vst [vmem:[#allocation2 + $0x6a8] sm:$0xff] %v1204
    %1461 = vst [vmem:[#allocation2 + $0x6b0] sm:$0xff] %v1205
    %1462 = vst [vmem:[#allocation2 + $0x6b8] sm:$0xff] %v1206
    %1463 = vst [vmem:[#allocation2 + $0x6c0] sm:$0xff] %v1207
    %1464 = vst [vmem:[#allocation2 + $0x6c8] sm:$0xff] %v1208
    %1465 = vst [vmem:[#allocation2 + $0x6d0] sm:$0xff] %v1209
    %1466 = vst [vmem:[#allocation2 + $0x6d8] sm:$0xff] %v1210
    %1467 = vst [vmem:[#allocation2 + $0x6e0] sm:$0xff] %v1211
    %1468 = vst [vmem:[#allocation2 + $0x6e8] sm:$0xff] %v1212
    %1469 = vst [vmem:[#allocation2 + $0x6f0] sm:$0xff] %v1213
    %1470 = vst [vmem:[#allocation2 + $0x6f8] sm:$0xff] %v1214
    %1471 = vst [vmem:[#allocation2 + $0x700] sm:$0xff] %v1215
    %1472 = vst [vmem:[#allocation2 + $0x708] sm:$0xff] %v1216
    %1473 = vst [vmem:[#allocation2 + $0x710] sm:$0xff] %v1217
    %1474 = vst [vmem:[#allocation2 + $0x718] sm:$0xff] %v1218
    %1475 = vst [vmem:[#allocation2 + $0x720] sm:$0xff] %v1219
    %1476 = vst [vmem:[#allocation2 + $0x728] sm:$0xff] %v1220
    %1477 = vst [vmem:[#allocation2 + $0x730] sm:$0xff] %v1221
    %1478 = vst [vmem:[#allocation2 + $0x738] sm:$0xff] %v1222
    %1479 = vst [vmem:[#allocation2 + $0x740] sm:$0xff] %v1223
    %1480 = vst [vmem:[#allocation2 + $0x748] sm:$0xff] %v1224
    %1481 = vst [vmem:[#allocation2 + $0x750] sm:$0xff] %v1225
    %1482 = vst [vmem:[#allocation2 + $0x758] sm:$0xff] %v1226
    %1483 = vst [vmem:[#allocation2 + $0x760] sm:$0xff] %v1227
    %1484 = vst [vmem:[#allocation2 + $0x768] sm:$0xff] %v1228
    %1485 = vst [vmem:[#allocation2 + $0x770] sm:$0xff] %v1229
    %1486 = vst [vmem:[#allocation2 + $0x778] sm:$0xff] %v1230
    %1487 = vst [vmem:[#allocation2 + $0x780] sm:$0xff] %v1231
    %1488 = vst [vmem:[#allocation2 + $0x788] sm:$0xff] %v1232
    %1489 = vst [vmem:[#allocation2 + $0x790] sm:$0xff] %v1233
    %1490 = vst [vmem:[#allocation2 + $0x798] sm:$0xff] %v1234
    %1491 = vst [vmem:[#allocation2 + $0x7a0] sm:$0xff] %v1235
    %1492 = vst [vmem:[#allocation2 + $0x7a8] sm:$0xff] %v1236
    %1493 = vst [vmem:[#allocation2 + $0x7b0] sm:$0xff] %v1237
    %1494 = vst [vmem:[#allocation2 + $0x7b8] sm:$0xff] %v1238
    %1495 = vst [vmem:[#allocation2 + $0x7c0] sm:$0xff] %v1239
    %1496 = vst [vmem:[#allocation2 + $0x7c8] sm:$0xff] %v1240
    %1497 = vst [vmem:[#allocation2 + $0x7d0] sm:$0xff] %v1241
    %1498 = vst [vmem:[#allocation2 + $0x7d8] sm:$0xff] %v1242
    %1499 = vst [vmem:[#allocation2 + $0x7e0] sm:$0xff] %v1243
    %1500 = vst [vmem:[#allocation2 + $0x7e8] sm:$0xff] %v1244
    %1501 = vst [vmem:[#allocation2 + $0x7f0] sm:$0xff] %v1245
    %1502 = vst [vmem:[#allocation2 + $0x7f8] sm:$0xff] %v1246
    // Predicated region
    $region14: #{tpu_custom_call.1} parent=1 // pred_check
      _
    $region15: #{tpu_custom_call.1} parent=1 // pred_check_branch
      %1504 = sbr.rel (0) target = $region17
    $region16: #{tpu_custom_call.1} parent=1 // pred_region
      %1506 = vsyncadd [#allocation3], 0
      %s1507 = sshll.u32 [#allocation2], 4
      %s1508 = int_to_ptr.vmem [resolvable:$true] %s1507
      %s1509 = sshll.u32 %s3, 4
      %s1510 = int_to_ptr.hbm [resolvable:$true] %s1509
      %1515 = dma.vmem_to_hbm [thread:$0]  %s1508, 32768, %s1510, [#allocation3], 512, 512, 32
    $region17: #{tpu_custom_call.1} parent=1 // pred_fallthru
      _
    // Predicated region
    $region18: #{tpu_custom_call.1} parent=1 // pred_check
      _
    $region19: #{tpu_custom_call.1} parent=1 // pred_check_branch
      %1517 = sbr.rel (0) target = $region21
    $region20: #{tpu_custom_call.1} parent=1 // pred_region
      %1519 = dma.done [#allocation3], 32768
    $region21: #{tpu_custom_call.1} parent=1 // pred_fallthru
      _
    %1520 = vsyncpa [#allocation3], 1

</llo_original>
